<compile_context>
chip_gen: v7x
topology: tpu7x:2x2x1
jax: 0.10.0
libtpu: 0.0.40
codegen_flags: <defaults>
</compile_context>

<pallas_src>
import math
import functools

import jax
import jax.numpy as jnp
from jax import lax
from jax.experimental import pallas as pl
from jax.experimental.pallas import tpu as pltpu


def mha_kernel(xq_ref, xkv_ref, wq_ref, wkv_ref, wo_ref, o_ref,
               q_s, kv_s, ho_s, *, num_heads, is_decoder):
    tq = xq_ref.shape[1]
    T = xkv_ref.shape[1]
    HD = wq_ref.shape[1]
    dk = HD // num_heads

    x_q = xq_ref[0]     # (tq, C) bf16 -- query rows of this tile
    x_kv = xkv_ref[0]   # (T,  C) bf16 -- full sequence for K/V

    # Fused, lane-dense projections (1/sqrt(C) scale is pre-folded into wq).
    q_s[...] = jnp.dot(x_q, wq_ref[...],
                       preferred_element_type=jnp.float32).astype(jnp.bfloat16)
    kv_s[...] = jnp.dot(x_kv, wkv_ref[...],
                        preferred_element_type=jnp.float32).astype(jnp.bfloat16)

    # Causal bias hoisted out of the head loop (finite value avoids NaNs).
    if is_decoder:
        q_start = pl.program_id(1) * tq
        row = lax.broadcasted_iota(jnp.int32, (tq, T), 0) + q_start
        col = lax.broadcasted_iota(jnp.int32, (tq, T), 1)
        bias = jnp.where(col <= row, 0.0, -1e30).astype(jnp.float32)

    # Small static unroll over heads; per-head results retire to VMEM scratch.
    for h in range(num_heads):
        q_h = q_s[:, h * dk:(h + 1) * dk]                 # (tq, dk) bf16
        k_h = kv_s[:, h * dk:(h + 1) * dk]                # (T,  dk) bf16
        v_h = kv_s[:, HD + h * dk:HD + (h + 1) * dk]      # (T,  dk) bf16

        # q @ k^T via dot_general contracting d_k (no materialized transpose).
        s = lax.dot_general(q_h, k_h, (((1,), (1,)), ((), ())),
                            preferred_element_type=jnp.float32)   # (tq, T) f32
        if is_decoder:
            s = s + bias

        m = jnp.max(s, axis=-1, keepdims=True)
        e = jnp.exp(s - m)
        l = jnp.sum(e, axis=-1, keepdims=True)
        p = (e * pl.reciprocal(l, approx=True)).astype(jnp.bfloat16)

        ho = jnp.dot(p, v_h, preferred_element_type=jnp.float32)  # (tq, dk)
        ho_s[:, h * dk:(h + 1) * dk] = ho.astype(jnp.bfloat16)

    # Single lane-dense output projection over the concatenated heads.
    out = jnp.dot(ho_s[...], wo_ref[...], preferred_element_type=jnp.float32)
    o_ref[0] = out.astype(o_ref.dtype)


def _pick_q_block(T, target=128):
    if T <= target:
        return T
    for cand in range(target, 7, -8):
        if T % cand == 0:
            return cand
    return T


def multi_head_attention(x, wq, wk, wv, wo, *, is_decoder=True, q_block=None):
    B, T, C = x.shape
    H, C2, dk = wq.shape
    assert C2 == C and C == H * dk, \
        "Embedding length of input is not equal to num_heads*d_k"
    HD = H * dk

    # Host-side weight prep: fold score scale into Wq, fuse K|V, cast to bf16.
    scale = 1.0 / math.sqrt(C)                 # PyTorch module uses C = d_model
    wq_f = (jnp.transpose(wq, (1, 0, 2)).reshape(C, HD) * scale).astype(jnp.bfloat16)
    wk_f = jnp.transpose(wk, (1, 0, 2)).reshape(C, HD)
    wv_f = jnp.transpose(wv, (1, 0, 2)).reshape(C, HD)
    wkv_f = jnp.concatenate([wk_f, wv_f], axis=-1).astype(jnp.bfloat16)
    wo_b = wo.astype(jnp.bfloat16)
    x_b = x.astype(jnp.bfloat16)

    tq = _pick_q_block(T) if q_block is None else q_block
    assert T % tq == 0 and (tq % 8 == 0 or tq == T)
    nq = T // tq

    kernel = functools.partial(mha_kernel, num_heads=H, is_decoder=is_decoder)
    return pl.pallas_call(
        kernel,
        out_shape=jax.ShapeDtypeStruct((B, T, C), x.dtype),
        grid=(B, nq),
        in_specs=[
            pl.BlockSpec((1, tq, C), lambda b, i: (b, i, 0)),    # x (query rows)
            pl.BlockSpec((1, T, C), lambda b, i: (b, 0, 0)),     # x (keys/values)
            pl.BlockSpec((C, HD), lambda b, i: (0, 0)),          # fused Wq (scaled)
            pl.BlockSpec((C, 2 * HD), lambda b, i: (0, 0)),      # fused [Wk | Wv]
            pl.BlockSpec((HD, C), lambda b, i: (0, 0)),          # Wo
        ],
        out_specs=pl.BlockSpec((1, tq, C), lambda b, i: (b, i, 0)),
        scratch_shapes=[
            pltpu.VMEM((tq, HD), jnp.bfloat16),       # Q projections
            pltpu.VMEM((T, 2 * HD), jnp.bfloat16),    # K|V projections
            pltpu.VMEM((tq, HD), jnp.bfloat16),       # concatenated head outputs
        ],
        compiler_params=pltpu.CompilerParams(
            dimension_semantics=("parallel", "parallel")),
    )(x_b, x_b, wq_f, wkv_f, wo_b)


def mha_reference(x, wq, wk, wv, wo, *, is_decoder=True):
    """Plain-JAX reference mirroring the PyTorch forward (eval mode)."""
    B, T, C = x.shape
    q = jnp.einsum("btc,hck->bhtk", x, wq)
    k = jnp.einsum("btc,hck->bhtk", x, wk)
    v = jnp.einsum("btc,hck->bhtk", x, wv)
    s = jnp.einsum("bhtk,bhsk->bhts", q, k) / math.sqrt(C)
    if is_decoder:
        mask = jnp.tril(jnp.ones((T, T), bool))
        s = jnp.where(mask, s, -jnp.inf)
    p = jax.nn.softmax(s, axis=-1)
    o = jnp.einsum("bhts,bhsk->bhtk", p, v)
    o = jnp.transpose(o, (0, 2, 1, 3)).reshape(B, T, -1)
    return o @ wo


if __name__ == "__main__":
    # Small configuration consistent with the module (d_model = H * d_k,
    # seq_len <= max_seq_len, decoder / causal heads).
    B, T = 2, 128
    H, dk = 4, 32
    C = H * dk                      # d_model = 128

    key = jax.random.PRNGKey(0)
    kx, kq, kk, kv, ko = jax.random.split(key, 5)

    x = jax.random.normal(kx, (B, T, C), jnp.float32)
    bound_in = 1.0 / math.sqrt(C)
    wq = jax.random.uniform(kq, (H, C, dk), jnp.float32, -bound_in, bound_in)
    wk = jax.random.uniform(kk, (H, C, dk), jnp.float32, -bound_in, bound_in)
    wv = jax.random.uniform(kv, (H, C, dk), jnp.float32, -bound_in, bound_in)
    bound_o = 1.0 / math.sqrt(H * dk)
    wo = jax.random.uniform(ko, (H * dk, C), jnp.float32, -bound_o, bound_o)

    out = multi_head_attention(x, wq, wk, wv, wo, is_decoder=True, q_block=64)
    out = jax.block_until_ready(out)

    # Reference computed in f32 from bf16-rounded inputs (kernel feeds the
    # MXU bf16), so only the in-kernel bf16/approx-reciprocal error remains.
    f32 = lambda a: a.astype(jnp.bfloat16).astype(jnp.float32)
    ref = mha_reference(f32(x), f32(wq), f32(wk), f32(wv), f32(wo),
                        is_decoder=True)

    assert out.shape == (B, T, C)
    assert jnp.allclose(out, ref, atol=2e-2, rtol=2e-2), "mismatch vs reference"

    print("KERNEL_OK")
</pallas_src>

<mosaic_0001>
module attributes {stable_mosaic.version = 11 : i64} {
  func.func @mha_kernel(%arg0: i32, %arg1: i32, %arg2: memref<1x64x128xbf16, #tpu.memory_space<vmem>>, %arg3: memref<1x128x128xbf16, #tpu.memory_space<vmem>>, %arg4: memref<128x128xbf16, #tpu.memory_space<vmem>>, %arg5: memref<128x256xbf16, #tpu.memory_space<vmem>>, %arg6: memref<128x128xbf16, #tpu.memory_space<vmem>>, %arg7: memref<1x64x128xf32, #tpu.memory_space<vmem>>, %arg8: memref<64x128xbf16, #tpu.memory_space<vmem>>, %arg9: memref<128x256xbf16, #tpu.memory_space<vmem>>, %arg10: memref<64x128xbf16, #tpu.memory_space<vmem>>) attributes {dimension_semantics = [#tpu.dimension_semantics<parallel>, #tpu.dimension_semantics<parallel>], iteration_bounds = array<i64: 2, 2>, scalar_prefetch = 0 : i64, scratch_operands = 3 : i64, tpu.core_type = #tpu.core_type<tc>, window_params = [{transform_indices = @transform_0, window_bounds = array<i64: 1, 64, 128>}, {transform_indices = @transform_1, window_bounds = array<i64: 1, 128, 128>}, {pipeline_mode = #tpu.pipeline_mode<synchronous>, transform_indices = @transform_2, window_bounds = array<i64: 128, 128>}, {pipeline_mode = #tpu.pipeline_mode<synchronous>, transform_indices = @transform_3, window_bounds = array<i64: 128, 256>}, {pipeline_mode = #tpu.pipeline_mode<synchronous>, transform_indices = @transform_4, window_bounds = array<i64: 128, 128>}, {transform_indices = @transform_5, window_bounds = array<i64: 1, 64, 128>}]} {
    %c0 = arith.constant 0 : index
    %c0_0 = arith.constant 0 : index
    %c0_1 = arith.constant 0 : index
    %0 = vector.load %arg2[%c0, %c0_0, %c0_1] : memref<1x64x128xbf16, #tpu.memory_space<vmem>>, vector<1x64x128xbf16>
    %1 = vector.shape_cast %0 : vector<1x64x128xbf16> to vector<64x128xbf16>
    %c0_2 = arith.constant 0 : index
    %c0_3 = arith.constant 0 : index
    %c0_4 = arith.constant 0 : index
    %2 = vector.load %arg3[%c0_2, %c0_3, %c0_4] : memref<1x128x128xbf16, #tpu.memory_space<vmem>>, vector<1x128x128xbf16>
    %3 = vector.shape_cast %2 : vector<1x128x128xbf16> to vector<128x128xbf16>
    %c0_5 = arith.constant 0 : index
    %c0_6 = arith.constant 0 : index
    %4 = vector.load %arg4[%c0_5, %c0_6] : memref<128x128xbf16, #tpu.memory_space<vmem>>, vector<128x128xbf16>
    %cst = arith.constant dense<0.000000e+00> : vector<64x128xf32>
    %5 = tpu.matmul %1, %4, %cst {dimension_numbers = #tpu.dot_dimension_numbers<[1], [0], [0], [1], [0, 0, 1, 1], [], []>} : vector<64x128xbf16>, vector<128x128xbf16>, vector<64x128xf32> -> vector<64x128xf32>
    %6 = arith.truncf %5 : vector<64x128xf32> to vector<64x128xbf16>
    %c0_7 = arith.constant 0 : index
    %c0_8 = arith.constant 0 : index
    %7 = vector.load %arg8[%c0_7, %c0_8] : memref<64x128xbf16, #tpu.memory_space<vmem>>, vector<64x128xbf16>
    tpu.vector_store %arg8[%c0_7, %c0_8], %6 {strides = array<i32>} : memref<64x128xbf16, #tpu.memory_space<vmem>>, vector<64x128xbf16>,
    %c0_9 = arith.constant 0 : index
    %c0_10 = arith.constant 0 : index
    %8 = vector.load %arg5[%c0_9, %c0_10] : memref<128x256xbf16, #tpu.memory_space<vmem>>, vector<128x256xbf16>
    %cst_11 = arith.constant dense<0.000000e+00> : vector<128x256xf32>
    %9 = tpu.matmul %3, %8, %cst_11 {dimension_numbers = #tpu.dot_dimension_numbers<[1], [0], [0], [1], [0, 0, 1, 1], [], []>} : vector<128x128xbf16>, vector<128x256xbf16>, vector<128x256xf32> -> vector<128x256xf32>
    %10 = arith.truncf %9 : vector<128x256xf32> to vector<128x256xbf16>
    %c0_12 = arith.constant 0 : index
    %c0_13 = arith.constant 0 : index
    %11 = vector.load %arg9[%c0_12, %c0_13] : memref<128x256xbf16, #tpu.memory_space<vmem>>, vector<128x256xbf16>
    tpu.vector_store %arg9[%c0_12, %c0_13], %10 {strides = array<i32>} : memref<128x256xbf16, #tpu.memory_space<vmem>>, vector<128x256xbf16>,
    %c64_i32 = arith.constant 64 : i32
    %12 = arith.muli %arg1, %c64_i32 : i32
    %13 = tpu.iota {dimensions = array<i32: 0>} : vector<64x128xi32>
    %14 = vector.broadcast %12 : i32 to vector<64x128xi32>
    %15 = arith.addi %13, %14 : vector<64x128xi32>
    %16 = tpu.iota {dimensions = array<i32: 1>} : vector<64x128xi32>
    %17 = arith.cmpi sle, %16, %15 : vector<64x128xi32>
    %cst_14 = arith.constant 0.000000e+00 : f32
    %cst_15 = arith.constant -1.000000e+30 : f32
    %18 = vector.broadcast %cst_14 : f32 to vector<64x128xf32>
    %19 = vector.broadcast %cst_15 : f32 to vector<64x128xf32>
    %20 = arith.select %17, %18, %19 : vector<64x128xi1>, vector<64x128xf32>
    %c0_16 = arith.constant 0 : index
    %c0_17 = arith.constant 0 : index
    %21 = vector.load %arg8[%c0_16, %c0_17] : memref<64x128xbf16, #tpu.memory_space<vmem>>, vector<64x32xbf16>
    %c0_18 = arith.constant 0 : index
    %c0_19 = arith.constant 0 : index
    %22 = vector.load %arg9[%c0_18, %c0_19] : memref<128x256xbf16, #tpu.memory_space<vmem>>, vector<128x32xbf16>
    %c0_20 = arith.constant 0 : index
    %c128 = arith.constant 128 : index
    %23 = vector.load %arg9[%c0_20, %c128] : memref<128x256xbf16, #tpu.memory_space<vmem>>, vector<128x32xbf16>
    %cst_21 = arith.constant dense<0.000000e+00> : vector<64x128xf32>
    %24 = tpu.matmul %21, %22, %cst_21 {dimension_numbers = #tpu.dot_dimension_numbers<[1], [1], [0], [0], [0, 0, 1, 0], [], []>} : vector<64x32xbf16>, vector<128x32xbf16>, vector<64x128xf32> -> vector<64x128xf32>
    %25 = arith.addf %24, %20 : vector<64x128xf32>
    %cst_22 = arith.constant dense<0xFF800000> : vector<64xf32>
    %26 = vector.multi_reduction <maximumf>, %25, %cst_22 [1] : vector<64x128xf32> to vector<64xf32>
    %27 = vector.shape_cast %26 : vector<64xf32> to vector<64x1xf32>
    %28 = vector.broadcast %27 : vector<64x1xf32> to vector<64x128xf32>
    %29 = arith.subf %25, %28 : vector<64x128xf32>
    %30 = math.exp %29 : vector<64x128xf32>
    %cst_23 = arith.constant dense<0.000000e+00> : vector<64xf32>
    %31 = vector.multi_reduction <add>, %30, %cst_23 [1] : vector<64x128xf32> to vector<64xf32>
    %32 = vector.shape_cast %31 : vector<64xf32> to vector<64x1xf32>
    %33 = tpu.reciprocal %32 {approx = true} : vector<64x1xf32> -> vector<64x1xf32>
    %34 = vector.broadcast %33 : vector<64x1xf32> to vector<64x128xf32>
    %35 = arith.mulf %30, %34 : vector<64x128xf32>
    %36 = arith.truncf %35 : vector<64x128xf32> to vector<64x128xbf16>
    %cst_24 = arith.constant dense<0.000000e+00> : vector<64x32xf32>
    %37 = tpu.matmul %36, %23, %cst_24 {dimension_numbers = #tpu.dot_dimension_numbers<[1], [0], [0], [1], [0, 0, 1, 1], [], []>} : vector<64x128xbf16>, vector<128x32xbf16>, vector<64x32xf32> -> vector<64x32xf32>
    %38 = arith.truncf %37 : vector<64x32xf32> to vector<64x32xbf16>
    %c0_25 = arith.constant 0 : index
    %c0_26 = arith.constant 0 : index
    %39 = vector.load %arg10[%c0_25, %c0_26] : memref<64x128xbf16, #tpu.memory_space<vmem>>, vector<64x32xbf16>
    tpu.vector_store %arg10[%c0_25, %c0_26], %38 {strides = array<i32>} : memref<64x128xbf16, #tpu.memory_space<vmem>>, vector<64x32xbf16>,
    %c0_27 = arith.constant 0 : index
    %c32 = arith.constant 32 : index
    %40 = vector.load %arg8[%c0_27, %c32] : memref<64x128xbf16, #tpu.memory_space<vmem>>, vector<64x32xbf16>
    %c0_28 = arith.constant 0 : index
    %c32_29 = arith.constant 32 : index
    %41 = vector.load %arg9[%c0_28, %c32_29] : memref<128x256xbf16, #tpu.memory_space<vmem>>, vector<128x32xbf16>
    %c0_30 = arith.constant 0 : index
    %c160 = arith.constant 160 : index
    %42 = vector.load %arg9[%c0_30, %c160] : memref<128x256xbf16, #tpu.memory_space<vmem>>, vector<128x32xbf16>
    %cst_31 = arith.constant dense<0.000000e+00> : vector<64x128xf32>
    %43 = tpu.matmul %40, %41, %cst_31 {dimension_numbers = #tpu.dot_dimension_numbers<[1], [1], [0], [0], [0, 0, 1, 0], [], []>} : vector<64x32xbf16>, vector<128x32xbf16>, vector<64x128xf32> -> vector<64x128xf32>
    %44 = arith.addf %43, %20 : vector<64x128xf32>
    %cst_32 = arith.constant dense<0xFF800000> : vector<64xf32>
    %45 = vector.multi_reduction <maximumf>, %44, %cst_32 [1] : vector<64x128xf32> to vector<64xf32>
    %46 = vector.shape_cast %45 : vector<64xf32> to vector<64x1xf32>
    %47 = vector.broadcast %46 : vector<64x1xf32> to vector<64x128xf32>
    %48 = arith.subf %44, %47 : vector<64x128xf32>
    %49 = math.exp %48 : vector<64x128xf32>
    %cst_33 = arith.constant dense<0.000000e+00> : vector<64xf32>
    %50 = vector.multi_reduction <add>, %49, %cst_33 [1] : vector<64x128xf32> to vector<64xf32>
    %51 = vector.shape_cast %50 : vector<64xf32> to vector<64x1xf32>
    %52 = tpu.reciprocal %51 {approx = true} : vector<64x1xf32> -> vector<64x1xf32>
    %53 = vector.broadcast %52 : vector<64x1xf32> to vector<64x128xf32>
    %54 = arith.mulf %49, %53 : vector<64x128xf32>
    %55 = arith.truncf %54 : vector<64x128xf32> to vector<64x128xbf16>
    %cst_34 = arith.constant dense<0.000000e+00> : vector<64x32xf32>
    %56 = tpu.matmul %55, %42, %cst_34 {dimension_numbers = #tpu.dot_dimension_numbers<[1], [0], [0], [1], [0, 0, 1, 1], [], []>} : vector<64x128xbf16>, vector<128x32xbf16>, vector<64x32xf32> -> vector<64x32xf32>
    %57 = arith.truncf %56 : vector<64x32xf32> to vector<64x32xbf16>
    %c0_35 = arith.constant 0 : index
    %c32_36 = arith.constant 32 : index
    %58 = vector.load %arg10[%c0_35, %c32_36] : memref<64x128xbf16, #tpu.memory_space<vmem>>, vector<64x32xbf16>
    tpu.vector_store %arg10[%c0_35, %c32_36], %57 {strides = array<i32>} : memref<64x128xbf16, #tpu.memory_space<vmem>>, vector<64x32xbf16>,
    %c0_37 = arith.constant 0 : index
    %c64 = arith.constant 64 : index
    %59 = vector.load %arg8[%c0_37, %c64] : memref<64x128xbf16, #tpu.memory_space<vmem>>, vector<64x32xbf16>
    %c0_38 = arith.constant 0 : index
    %c64_39 = arith.constant 64 : index
    %60 = vector.load %arg9[%c0_38, %c64_39] : memref<128x256xbf16, #tpu.memory_space<vmem>>, vector<128x32xbf16>
    %c0_40 = arith.constant 0 : index
    %c192 = arith.constant 192 : index
    %61 = vector.load %arg9[%c0_40, %c192] : memref<128x256xbf16, #tpu.memory_space<vmem>>, vector<128x32xbf16>
    %cst_41 = arith.constant dense<0.000000e+00> : vector<64x128xf32>
    %62 = tpu.matmul %59, %60, %cst_41 {dimension_numbers = #tpu.dot_dimension_numbers<[1], [1], [0], [0], [0, 0, 1, 0], [], []>} : vector<64x32xbf16>, vector<128x32xbf16>, vector<64x128xf32> -> vector<64x128xf32>
    %63 = arith.addf %62, %20 : vector<64x128xf32>
    %cst_42 = arith.constant dense<0xFF800000> : vector<64xf32>
    %64 = vector.multi_reduction <maximumf>, %63, %cst_42 [1] : vector<64x128xf32> to vector<64xf32>
    %65 = vector.shape_cast %64 : vector<64xf32> to vector<64x1xf32>
    %66 = vector.broadcast %65 : vector<64x1xf32> to vector<64x128xf32>
    %67 = arith.subf %63, %66 : vector<64x128xf32>
    %68 = math.exp %67 : vector<64x128xf32>
    %cst_43 = arith.constant dense<0.000000e+00> : vector<64xf32>
    %69 = vector.multi_reduction <add>, %68, %cst_43 [1] : vector<64x128xf32> to vector<64xf32>
    %70 = vector.shape_cast %69 : vector<64xf32> to vector<64x1xf32>
    %71 = tpu.reciprocal %70 {approx = true} : vector<64x1xf32> -> vector<64x1xf32>
    %72 = vector.broadcast %71 : vector<64x1xf32> to vector<64x128xf32>
    %73 = arith.mulf %68, %72 : vector<64x128xf32>
    %74 = arith.truncf %73 : vector<64x128xf32> to vector<64x128xbf16>
    %cst_44 = arith.constant dense<0.000000e+00> : vector<64x32xf32>
    %75 = tpu.matmul %74, %61, %cst_44 {dimension_numbers = #tpu.dot_dimension_numbers<[1], [0], [0], [1], [0, 0, 1, 1], [], []>} : vector<64x128xbf16>, vector<128x32xbf16>, vector<64x32xf32> -> vector<64x32xf32>
    %76 = arith.truncf %75 : vector<64x32xf32> to vector<64x32xbf16>
    %c0_45 = arith.constant 0 : index
    %c64_46 = arith.constant 64 : index
    %77 = vector.load %arg10[%c0_45, %c64_46] : memref<64x128xbf16, #tpu.memory_space<vmem>>, vector<64x32xbf16>
    tpu.vector_store %arg10[%c0_45, %c64_46], %76 {strides = array<i32>} : memref<64x128xbf16, #tpu.memory_space<vmem>>, vector<64x32xbf16>,
    %c0_47 = arith.constant 0 : index
    %c96 = arith.constant 96 : index
    %78 = vector.load %arg8[%c0_47, %c96] : memref<64x128xbf16, #tpu.memory_space<vmem>>, vector<64x32xbf16>
    %c0_48 = arith.constant 0 : index
    %c96_49 = arith.constant 96 : index
    %79 = vector.load %arg9[%c0_48, %c96_49] : memref<128x256xbf16, #tpu.memory_space<vmem>>, vector<128x32xbf16>
    %c0_50 = arith.constant 0 : index
    %c224 = arith.constant 224 : index
    %80 = vector.load %arg9[%c0_50, %c224] : memref<128x256xbf16, #tpu.memory_space<vmem>>, vector<128x32xbf16>
    %cst_51 = arith.constant dense<0.000000e+00> : vector<64x128xf32>
    %81 = tpu.matmul %78, %79, %cst_51 {dimension_numbers = #tpu.dot_dimension_numbers<[1], [1], [0], [0], [0, 0, 1, 0], [], []>} : vector<64x32xbf16>, vector<128x32xbf16>, vector<64x128xf32> -> vector<64x128xf32>
    %82 = arith.addf %81, %20 : vector<64x128xf32>
    %cst_52 = arith.constant dense<0xFF800000> : vector<64xf32>
    %83 = vector.multi_reduction <maximumf>, %82, %cst_52 [1] : vector<64x128xf32> to vector<64xf32>
    %84 = vector.shape_cast %83 : vector<64xf32> to vector<64x1xf32>
    %85 = vector.broadcast %84 : vector<64x1xf32> to vector<64x128xf32>
    %86 = arith.subf %82, %85 : vector<64x128xf32>
    %87 = math.exp %86 : vector<64x128xf32>
    %cst_53 = arith.constant dense<0.000000e+00> : vector<64xf32>
    %88 = vector.multi_reduction <add>, %87, %cst_53 [1] : vector<64x128xf32> to vector<64xf32>
    %89 = vector.shape_cast %88 : vector<64xf32> to vector<64x1xf32>
    %90 = tpu.reciprocal %89 {approx = true} : vector<64x1xf32> -> vector<64x1xf32>
    %91 = vector.broadcast %90 : vector<64x1xf32> to vector<64x128xf32>
    %92 = arith.mulf %87, %91 : vector<64x128xf32>
    %93 = arith.truncf %92 : vector<64x128xf32> to vector<64x128xbf16>
    %cst_54 = arith.constant dense<0.000000e+00> : vector<64x32xf32>
    %94 = tpu.matmul %93, %80, %cst_54 {dimension_numbers = #tpu.dot_dimension_numbers<[1], [0], [0], [1], [0, 0, 1, 1], [], []>} : vector<64x128xbf16>, vector<128x32xbf16>, vector<64x32xf32> -> vector<64x32xf32>
    %95 = arith.truncf %94 : vector<64x32xf32> to vector<64x32xbf16>
    %c0_55 = arith.constant 0 : index
    %c96_56 = arith.constant 96 : index
    %96 = vector.load %arg10[%c0_55, %c96_56] : memref<64x128xbf16, #tpu.memory_space<vmem>>, vector<64x32xbf16>
    tpu.vector_store %arg10[%c0_55, %c96_56], %95 {strides = array<i32>} : memref<64x128xbf16, #tpu.memory_space<vmem>>, vector<64x32xbf16>,
    %c0_57 = arith.constant 0 : index
    %c0_58 = arith.constant 0 : index
    %97 = vector.load %arg10[%c0_57, %c0_58] : memref<64x128xbf16, #tpu.memory_space<vmem>>, vector<64x128xbf16>
    %c0_59 = arith.constant 0 : index
    %c0_60 = arith.constant 0 : index
    %98 = vector.load %arg6[%c0_59, %c0_60] : memref<128x128xbf16, #tpu.memory_space<vmem>>, vector<128x128xbf16>
    %cst_61 = arith.constant dense<0.000000e+00> : vector<64x128xf32>
    %99 = tpu.matmul %97, %98, %cst_61 {dimension_numbers = #tpu.dot_dimension_numbers<[1], [0], [0], [1], [0, 0, 1, 1], [], []>} : vector<64x128xbf16>, vector<128x128xbf16>, vector<64x128xf32> -> vector<64x128xf32>
    %c0_62 = arith.constant 0 : index
    %c0_63 = arith.constant 0 : index
    %c0_64 = arith.constant 0 : index
    %100 = vector.load %arg7[%c0_62, %c0_63, %c0_64] : memref<1x64x128xf32, #tpu.memory_space<vmem>>, vector<1x64x128xf32>
    %101 = vector.shape_cast %100 : vector<1x64x128xf32> to vector<64x128xf32>
    %102 = vector.shape_cast %99 : vector<64x128xf32> to vector<1x64x128xf32>
    tpu.vector_store %arg7[%c0_62, %c0_63, %c0_64], %102 {strides = array<i32>} : memref<1x64x128xf32, #tpu.memory_space<vmem>>, vector<1x64x128xf32>,
    return
  }
  func.func @transform_0(%arg0: i32, %arg1: i32) -> (i32, i32, i32) {
    %c0_i32 = arith.constant 0 : i32
    %c0_i32_0 = arith.constant 0 : i32
    return %arg0, %arg1, %c0_i32 : i32, i32, i32
  }
  func.func @transform_1(%arg0: i32, %arg1: i32) -> (i32, i32, i32) {
    %c0_i32 = arith.constant 0 : i32
    %c0_i32_0 = arith.constant 0 : i32
    %c0_i32_1 = arith.constant 0 : i32
    return %arg0, %c0_i32, %c0_i32_0 : i32, i32, i32
  }
  func.func @transform_2(%arg0: i32, %arg1: i32) -> (i32, i32) {
    %c0_i32 = arith.constant 0 : i32
    %c0_i32_0 = arith.constant 0 : i32
    %c0_i32_1 = arith.constant 0 : i32
    return %c0_i32, %c0_i32_0 : i32, i32
  }
  func.func @transform_3(%arg0: i32, %arg1: i32) -> (i32, i32) {
    %c0_i32 = arith.constant 0 : i32
    %c0_i32_0 = arith.constant 0 : i32
    %c0_i32_1 = arith.constant 0 : i32
    return %c0_i32, %c0_i32_0 : i32, i32
  }
  func.func @transform_4(%arg0: i32, %arg1: i32) -> (i32, i32) {
    %c0_i32 = arith.constant 0 : i32
    %c0_i32_0 = arith.constant 0 : i32
    %c0_i32_1 = arith.constant 0 : i32
    return %c0_i32, %c0_i32_0 : i32, i32
  }
  func.func @transform_5(%arg0: i32, %arg1: i32) -> (i32, i32, i32) {
    %c0_i32 = arith.constant 0 : i32
    %c0_i32_0 = arith.constant 0 : i32
    return %arg0, %arg1, %c0_i32 : i32, i32, i32
  }
}

</mosaic_0001>

<llo_original>
// kernel: tpu_custom_call.1
$region0: #{tpu_custom_call.1}
  #allocation0 [shape = 'u32[]', space=smem, size = 0x4, offset = 0x4, fixed_abs, tag = 'smem constant byte address 0x4 - core index']
  #allocation1 [shape = 'u32[144,128]{1,0:T(1,128)}', space=vmem, size = 0x12000, scoped, tag = 'internal scratch']
  #allocation2 [shape = 'bf16[64,128]{1,0:T(16,128)(2,1)}', space=vmem, size = 0x4000, scoped, tag = 'scratch operand']
  #allocation3 [shape = 'bf16[128,256]{1,0:T(16,128)(2,1)}', space=vmem, size = 0x10000, scoped, tag = 'scratch operand']
  #allocation4 [shape = 'bf16[64,128]{1,0:T(16,128)(2,1)}', space=vmem, size = 0x4000, scoped, tag = 'scratch operand']
  %s0 = inlined_call_operand.hbm [shape: bf16[2,128,128], index: 0, kind: input, shape index: {}]
  %s1 = inlined_call_operand.hbm [shape: bf16[2,128,128], index: 1, kind: input, shape index: {}]
  %s2 = inlined_call_operand.hbm [shape: bf16[128,128], index: 2, kind: input, shape index: {}]
  %s3 = inlined_call_operand.hbm [shape: bf16[128,256], index: 3, kind: input, shape index: {}]
  %s4 = inlined_call_operand.hbm [shape: bf16[128,128], index: 4, kind: input, shape index: {}]
  %s5 = inlined_call_operand.hbm [shape: f32[2,128,128], index: 5, kind: output, shape index: {}]
  %s6 = sld [smem:[#allocation0]]
  $region73: #{tpu_custom_call.1} parent=0
    _
  %s8 = ssub.s32 1, %s6
  %s9 = scalar_select 0, %s8, %s6
  $region1: #{tpu_custom_call.1} parent=0
    #allocation5 [shape = 'u8[32768]{0}', space=vmem, size = 0x8000, scoped, tag = 'input window, operand 0']
    #allocation6 [shape = 's32[2]{0}', space=sflag, size = 0x8, scoped, tag = 'scoped memory for tpu_custom_call.1']
    #allocation7 [shape = 's32[2]{0}', space=sflag, size = 0x8, scoped, tag = 'scoped memory for tpu_custom_call.1']
    #allocation8 [shape = 'u8[65536]{0}', space=vmem, size = 0x10000, scoped, tag = 'input window, operand 1']
    #allocation9 [shape = 's32[2]{0}', space=sflag, size = 0x8, scoped, tag = 'scoped memory for tpu_custom_call.1']
    #allocation10 [shape = 'u8[32768]{0}', space=vmem, size = 0x8000, scoped, tag = 'input window, operand 2, single buffered']
    #allocation11 [shape = 'u8[65536]{0}', space=vmem, size = 0x10000, scoped, tag = 'input window, operand 3, single buffered']
    #allocation12 [shape = 's32[1]{0}', space=sflag, size = 0x4, scoped, tag = 'scoped memory for tpu_custom_call.1']
    #allocation13 [shape = 'u8[32768]{0}', space=vmem, size = 0x8000, scoped, tag = 'input window, operand 4, single buffered']
    #allocation14 [shape = 'u8[65536]{0}', space=vmem, size = 0x10000, scoped, tag = 'output window, operand 0']
    %10 = vsyncpa [#allocation6], 0
    %s11 = scalar_lea.sflag [#allocation6], 1
    %12 = vsyncpa %s11, 0
    %13 = vsyncpa [#allocation9], 0
    %s14 = scalar_lea.sflag [#allocation9], 1
    %15 = vsyncpa %s14, 0
    %16 = vsyncpa [#allocation12], 0
    %17 = vsyncpa [#allocation7], 0
    %s18 = scalar_lea.sflag [#allocation7], 1
    %19 = vsyncpa %s18, 0
    loop: start=0, step=1, limit=6
    $region2: #{tpu_custom_call.1} parent=1 // loop_pre_header
      _
    $region3: #{tpu_custom_call.1} parent=1 // loop_header
      %s21 = sphi 0, %s25
      %p22 = scmp.ge.s32.totalorder %s21, 6
      %s28 = sphi 0, %s40
      %s29 = sphi 0, %s36
      %s30 = sphi 0, %s28
      %s31 = sphi 0, %s29
      %s32 = sphi 0, %s30
      %s33 = sphi 0, %s31
      %s45 = sphi 0, %s47
      %s48 = sphi 0, %s45
      %s49 = sphi 0, %s48
      %s65 = sphi 0, %s49
      %s71 = sphi 0, %s73
      %s74 = sphi 0, %s71
      %s75 = sphi 0, %s74
      %s91 = sphi 0, %s75
      %s95 = sphi 0, %s95
      %s97 = sphi 0, %s95
      %s98 = sphi 0, %s97
      %s112 = sphi 0, %s98
      %s116 = sphi 0, %s116
      %s118 = sphi 0, %s116
      %s119 = sphi 0, %s118
      %s133 = sphi 0, %s119
      %s137 = sphi 0, %s137
      %s139 = sphi 0, %s137
      %s140 = sphi 0, %s139
      %s154 = sphi 0, %s140
      %s162 = sphi 0, %s164
      %s165 = sphi 0, %s162
      %s166 = sphi 0, %s165
      %s182 = sphi 0, %s166
    $region4: #{tpu_custom_call.1} parent=1 // loop_header_branch
      %24 = sbr.rel (%p22) target = $region8
    $region5: #{tpu_custom_call.1} parent=1 // loop_body
      %s26 = ssub.s32 %s21, 1
      %s27 = ssub.s32 %s21, 2
      %s34 = sadd.s32 1, %s29
      %p35 = scmp.ge.s32.totalorder %s34, 2
      %s36 = scalar_select %p35, 0, %s34
      %s37 = sadd.s32 1, %s28
      %s38 = scalar_select %p35, %s37, %s28
      %p39 = scmp.ge.s32.totalorder %s38, 2
      %s40 = scalar_select %p39, 0, %s38
      %s41 = ssub.s32 %s28, %s40
      %s42 = ssub.s32 %s29, %s36
      %s43 = sor.u32 %s41, %s42
      %p44 = scmp.eq.s32.totalorder %s43, 0
      %s46 = sadd.s32 %s45, 1
      %s47 = scalar_select %p44, %s45, %s46
      %p50 = pneg %p44
      %p51 = scmp.eq.s32.totalorder %s21, 3
      %p52 = por %p50, %p51
      %p53 = scmp.ne.s32.totalorder %s45, %s48
      %p54 = scmp.eq.s32.totalorder %s21, 0
      %p55 = por %p53, %p54
      %p56 = scmp.ne.s32.totalorder %s45, %s48
      %p57 = scmp.eq.s32.totalorder %s26, 3
      %p58 = por %p56, %p57
      %p59 = scmp.ne.s32.totalorder %s48, %s49
      %p60 = scmp.eq.s32.totalorder %s26, 0
      %p61 = por %p59, %p60
      %p62 = scmp.ne.s32.totalorder %s48, %s49
      %p63 = scmp.eq.s32.totalorder %s27, 3
      %p64 = por %p62, %p63
      %p66 = scmp.ne.s32.totalorder %s49, %s65
      %p67 = scmp.eq.s32.totalorder %s27, 0
      %p68 = por %p66, %p67
      %s69 = ssub.s32 %s28, %s40
      %p70 = scmp.eq.s32.totalorder %s69, 0
      %s72 = sadd.s32 %s71, 1
      %s73 = scalar_select %p70, %s71, %s72
      %p76 = pneg %p70
      %p77 = scmp.eq.s32.totalorder %s21, 3
      %p78 = por %p76, %p77
      %p79 = scmp.ne.s32.totalorder %s71, %s74
      %p80 = scmp.eq.s32.totalorder %s21, 0
      %p81 = por %p79, %p80
      %p82 = scmp.ne.s32.totalorder %s71, %s74
      %p83 = scmp.eq.s32.totalorder %s26, 3
      %p84 = por %p82, %p83
      %p85 = scmp.ne.s32.totalorder %s74, %s75
      %p86 = scmp.eq.s32.totalorder %s26, 0
      %p87 = por %p85, %p86
      %p88 = scmp.ne.s32.totalorder %s74, %s75
      %p89 = scmp.eq.s32.totalorder %s27, 3
      %p90 = por %p88, %p89
      %p92 = scmp.ne.s32.totalorder %s75, %s91
      %p93 = scmp.eq.s32.totalorder %s27, 0
      %p94 = por %p92, %p93
      %s96 = sadd.s32 %s95, 1
      %p99 = scmp.eq.s32.totalorder %s21, 3
      %p100 = scmp.ne.s32.totalorder %s95, %s97
      %p101 = scmp.eq.s32.totalorder %s21, 0
      %p102 = por %p100, %p101
      %p103 = scmp.ne.s32.totalorder %s95, %s97
      %p104 = scmp.eq.s32.totalorder %s26, 3
      %p105 = por %p103, %p104
      %p106 = scmp.ne.s32.totalorder %s97, %s98
      %p107 = scmp.eq.s32.totalorder %s26, 0
      %p108 = por %p106, %p107
      %p109 = scmp.ne.s32.totalorder %s97, %s98
      %p110 = scmp.eq.s32.totalorder %s27, 3
      %p111 = por %p109, %p110
      %p113 = scmp.ne.s32.totalorder %s98, %s112
      %p114 = scmp.eq.s32.totalorder %s27, 0
      %p115 = por %p113, %p114
      %s117 = sadd.s32 %s116, 1
      %p120 = scmp.eq.s32.totalorder %s21, 3
      %p121 = scmp.ne.s32.totalorder %s116, %s118
      %p122 = scmp.eq.s32.totalorder %s21, 0
      %p123 = por %p121, %p122
      %p124 = scmp.ne.s32.totalorder %s116, %s118
      %p125 = scmp.eq.s32.totalorder %s26, 3
      %p126 = por %p124, %p125
      %p127 = scmp.ne.s32.totalorder %s118, %s119
      %p128 = scmp.eq.s32.totalorder %s26, 0
      %p129 = por %p127, %p128
      %p130 = scmp.ne.s32.totalorder %s118, %s119
      %p131 = scmp.eq.s32.totalorder %s27, 3
      %p132 = por %p130, %p131
      %p134 = scmp.ne.s32.totalorder %s119, %s133
      %p135 = scmp.eq.s32.totalorder %s27, 0
      %p136 = por %p134, %p135
      %s138 = sadd.s32 %s137, 1
      %p141 = scmp.eq.s32.totalorder %s21, 3
      %p142 = scmp.ne.s32.totalorder %s137, %s139
      %p143 = scmp.eq.s32.totalorder %s21, 0
      %p144 = por %p142, %p143
      %p145 = scmp.ne.s32.totalorder %s137, %s139
      %p146 = scmp.eq.s32.totalorder %s26, 3
      %p147 = por %p145, %p146
      %p148 = scmp.ne.s32.totalorder %s139, %s140
      %p149 = scmp.eq.s32.totalorder %s26, 0
      %p150 = por %p148, %p149
      %p151 = scmp.ne.s32.totalorder %s139, %s140
      %p152 = scmp.eq.s32.totalorder %s27, 3
      %p153 = por %p151, %p152
      %p155 = scmp.ne.s32.totalorder %s140, %s154
      %p156 = scmp.eq.s32.totalorder %s27, 0
      %p157 = por %p155, %p156
      %s158 = ssub.s32 %s28, %s40
      %s159 = ssub.s32 %s29, %s36
      %s160 = sor.u32 %s158, %s159
      %p161 = scmp.eq.s32.totalorder %s160, 0
      %s163 = sadd.s32 %s162, 1
      %s164 = scalar_select %p161, %s162, %s163
      %p167 = pneg %p161
      %p168 = scmp.eq.s32.totalorder %s21, 3
      %p169 = por %p167, %p168
      %p170 = scmp.ne.s32.totalorder %s162, %s165
      %p171 = scmp.eq.s32.totalorder %s21, 0
      %p172 = por %p170, %p171
      %p173 = scmp.ne.s32.totalorder %s162, %s165
      %p174 = scmp.eq.s32.totalorder %s26, 3
      %p175 = por %p173, %p174
      %p176 = scmp.ne.s32.totalorder %s165, %s166
      %p177 = scmp.eq.s32.totalorder %s26, 0
      %p178 = por %p176, %p177
      %p179 = scmp.ne.s32.totalorder %s165, %s166
      %p180 = scmp.eq.s32.totalorder %s27, 3
      %p181 = por %p179, %p180
      %p183 = scmp.ne.s32.totalorder %s166, %s182
      %p184 = scmp.eq.s32.totalorder %s27, 0
      %p185 = por %p183, %p184
      %p186 = scmp.le.s32.totalorder 1, %s21
      %p187 = scmp.lt.s32.totalorder %s21, 5
      %p188 = pnand %p186, %p187
      %p189 = pneg %p188
      // Predicated region
      $region9: #{tpu_custom_call.1} parent=5 // pred_check
        _
      $region10: #{tpu_custom_call.1} parent=5 // pred_check_branch
        %191 = sbr.rel (%p188) target = $region12
      $region11: #{tpu_custom_call.1} parent=5 // pred_region
        %s192 = ssub.s32 %s21, 1
        // Predicated region
        $region13: #{tpu_custom_call.1} parent=11 // pred_check
          %p193 = pneg %p108
        $region14: #{tpu_custom_call.1} parent=11 // pred_check_branch
          %195 = sbr.rel (%p193) target = $region16
        $region15: #{tpu_custom_call.1} parent=11 // pred_region
          %s197 = ssub.s32 1024, 1024
          %198 = vsyncadd [#allocation9], %s197
          %s199 = sshll.u32 [#allocation10], 4
          %s200 = int_to_ptr.vmem [resolvable:$true] %s199
          %205 = dma.hbm_to_vmem [thread:$0]  %s2, 1024, %s200, [#allocation9], 64, 64, 4
        $region16: #{tpu_custom_call.1} parent=11 // pred_fallthru
          _
        // Predicated region
        $region17: #{tpu_custom_call.1} parent=11 // pred_check
          %p206 = pneg %p129
        $region18: #{tpu_custom_call.1} parent=11 // pred_check_branch
          %208 = sbr.rel (%p206) target = $region20
        $region19: #{tpu_custom_call.1} parent=11 // pred_region
          %s210 = ssub.s32 2048, 2048
          %211 = vsyncadd [#allocation12], %s210
          %s212 = sshll.u32 [#allocation11], 4
          %s213 = int_to_ptr.vmem [resolvable:$true] %s212
          %218 = dma.hbm_to_vmem [thread:$0]  %s3, 2048, %s213, [#allocation12], 128, 128, 8
        $region20: #{tpu_custom_call.1} parent=11 // pred_fallthru
          _
        // Predicated region
        $region21: #{tpu_custom_call.1} parent=11 // pred_check
          %p219 = pneg %p150
        $region22: #{tpu_custom_call.1} parent=11 // pred_check_branch
          %221 = sbr.rel (%p219) target = $region24
        $region23: #{tpu_custom_call.1} parent=11 // pred_region
          %s223 = ssub.s32 1024, 1024
          %224 = vsyncadd [#allocation12], %s223
          %s225 = sshll.u32 [#allocation13], 4
          %s226 = int_to_ptr.vmem [resolvable:$true] %s225
          %231 = dma.hbm_to_vmem [thread:$0]  %s4, 1024, %s226, [#allocation12], 64, 64, 4
        $region24: #{tpu_custom_call.1} parent=11 // pred_fallthru
          _
      $region12: #{tpu_custom_call.1} parent=5 // pred_fallthru
        _
      %p232 = scmp.lt.s32.totalorder %s21, 4
      // Predicated region
      $region25: #{tpu_custom_call.1} parent=5 // pred_check
        %p233 = pneg %p232
      $region26: #{tpu_custom_call.1} parent=5 // pred_check_branch
        %235 = sbr.rel (%p233) target = $region28
      $region27: #{tpu_custom_call.1} parent=5 // pred_region
        // Predicated region
        $region29: #{tpu_custom_call.1} parent=27 // pred_check
          %p236 = pneg %p55
        $region30: #{tpu_custom_call.1} parent=27 // pred_check_branch
          %238 = sbr.rel (%p236) target = $region32
        $region31: #{tpu_custom_call.1} parent=27 // pred_region
          %s239 = sand.u32 %s45, 1
          %s240 = scalar_lea.sflag [#allocation6], %s239
          %s241 = sand.u32 %s45, 1
          %s242 = smul.addr %s241, 32
          %s243 = scalar_lea.vmem [#allocation5], %s242
          %s244 = smul.u32 8, %s29
          %s246 = ssub.s32 512, 512
          %247 = vsyncadd %s240, %s246
          %s248 = smul.addr %s28, 16
          %s249 = sadd.s32 %s244, %s248
          %s250 = smul.addr %s249, 64
          %s251 = scalar_lea.hbm %s0, %s250
          %s252 = sshll.u32 %s243, 4
          %s253 = int_to_ptr.vmem [resolvable:$true] %s252
          %258 = dma.hbm_to_vmem [thread:$0]  %s251, 512, %s253, %s240, 64, 64, 4
        $region32: #{tpu_custom_call.1} parent=27 // pred_fallthru
          _
        // Predicated region
        $region33: #{tpu_custom_call.1} parent=27 // pred_check
          %p259 = pneg %p81
        $region34: #{tpu_custom_call.1} parent=27 // pred_check_branch
          %261 = sbr.rel (%p259) target = $region36
        $region35: #{tpu_custom_call.1} parent=27 // pred_region
          %s262 = sand.u32 %s21, 1
          %s263 = scalar_lea.sflag [#allocation9], %s262
          %s264 = sand.u32 %s71, 1
          %s265 = smul.addr %s264, 64
          %s266 = scalar_lea.vmem [#allocation8], %s265
          %s268 = ssub.s32 1024, 1024
          %269 = vsyncadd %s263, %s268
          %s270 = smul.addr %s28, 16
          %s271 = smul.addr %s270, 64
          %s272 = scalar_lea.hbm %s1, %s271
          %s273 = sshll.u32 %s266, 4
          %s274 = int_to_ptr.vmem [resolvable:$true] %s273
          %279 = dma.hbm_to_vmem [thread:$0]  %s272, 1024, %s274, %s263, 64, 64, 4
        $region36: #{tpu_custom_call.1} parent=27 // pred_fallthru
          _
      $region28: #{tpu_custom_call.1} parent=5 // pred_fallthru
        _
      %p280 = scmp.le.s32.totalorder 1, %s21
      %p281 = scmp.lt.s32.totalorder %s21, 5
      %p282 = pnand %p280, %p281
      %p283 = pneg %p282
      // Predicated region
      $region37: #{tpu_custom_call.1} parent=5 // pred_check
        _
      $region38: #{tpu_custom_call.1} parent=5 // pred_check_branch
        %285 = sbr.rel (%p282) target = $region40
      $region39: #{tpu_custom_call.1} parent=5 // pred_region
        %s286 = ssub.s32 %s21, 1
        %s287 = sand.u32 %s48, 1
        %s288 = scalar_lea.sflag [#allocation6], %s287
        %s289 = sand.u32 %s48, 1
        %s290 = smul.addr %s289, 32
        %s291 = scalar_lea.vmem [#allocation5], %s290
        // Predicated region
        $region41: #{tpu_custom_call.1} parent=39 // pred_check
          %p292 = pneg %p61
        $region42: #{tpu_custom_call.1} parent=39 // pred_check_branch
          %294 = sbr.rel (%p292) target = $region44
        $region43: #{tpu_custom_call.1} parent=39 // pred_region
          %295 = dma.done %s288, 512
        $region44: #{tpu_custom_call.1} parent=39 // pred_fallthru
          _
        %s296 = sand.u32 %s26, 1
        %s297 = scalar_lea.sflag [#allocation9], %s296
        %s298 = sand.u32 %s74, 1
        %s299 = smul.addr %s298, 64
        %s300 = scalar_lea.vmem [#allocation8], %s299
        // Predicated region
        $region45: #{tpu_custom_call.1} parent=39 // pred_check
          %p301 = pneg %p87
        $region46: #{tpu_custom_call.1} parent=39 // pred_check_branch
          %303 = sbr.rel (%p301) target = $region48
        $region47: #{tpu_custom_call.1} parent=39 // pred_region
          %304 = dma.done %s297, 1024
        $region48: #{tpu_custom_call.1} parent=39 // pred_fallthru
          _
        // Predicated region
        $region49: #{tpu_custom_call.1} parent=39 // pred_check
          %p305 = pneg %p108
        $region50: #{tpu_custom_call.1} parent=39 // pred_check_branch
          %307 = sbr.rel (%p305) target = $region52
        $region51: #{tpu_custom_call.1} parent=39 // pred_region
          %308 = dma.done [#allocation9], 1024
        $region52: #{tpu_custom_call.1} parent=39 // pred_fallthru
          _
        // Predicated region
        $region53: #{tpu_custom_call.1} parent=39 // pred_check
          %p309 = pneg %p129
        $region54: #{tpu_custom_call.1} parent=39 // pred_check_branch
          %311 = sbr.rel (%p309) target = $region56
        $region55: #{tpu_custom_call.1} parent=39 // pred_region
          %312 = dma.done [#allocation12], 2048
        $region56: #{tpu_custom_call.1} parent=39 // pred_fallthru
          _
        // Predicated region
        $region57: #{tpu_custom_call.1} parent=39 // pred_check
          %p313 = pneg %p150
        $region58: #{tpu_custom_call.1} parent=39 // pred_check_branch
          %315 = sbr.rel (%p313) target = $region60
        $region59: #{tpu_custom_call.1} parent=39 // pred_region
          %316 = dma.done [#allocation12], 1024
        $region60: #{tpu_custom_call.1} parent=39 // pred_fallthru
          _
        %s317 = sand.u32 %s48, 1
        %s318 = scalar_lea.sflag [#allocation6], %s317
        %s319 = sand.u32 %s48, 1
        %s320 = smul.addr %s319, 32
        %s321 = scalar_lea.vmem [#allocation5], %s320
        %p322 = pneg %p61
        %p323 = pneg %p58
        %s324 = sand.u32 %s26, 1
        %s325 = scalar_lea.sflag [#allocation9], %s324
        %s326 = sand.u32 %s74, 1
        %s327 = smul.addr %s326, 64
        %s328 = scalar_lea.vmem [#allocation8], %s327
        %p329 = pneg %p87
        %p330 = pneg %p84
        %p331 = pneg %p108
        %p332 = pneg %p105
        %p333 = pneg %p129
        %p334 = pneg %p126
        %p335 = pneg %p150
        %p336 = pneg %p147
        %p337 = pneg %p178
        %p338 = pneg %p175
        %s339 = sand.u32 %s165, 1
        %s340 = scalar_lea.sflag [#allocation7], %s339
        %s341 = sand.u32 %s165, 1
        %s342 = smul.addr %s341, 64
        %s343 = scalar_lea.vmem [#allocation14], %s342
        %s344 = smul.u32 8, %s31
        %s345 = smul.u32 8, %s31
        %v347 = vld [vmem:[%s291] sm:$0xf]
        %v348 = vld [vmem:[%s291 + $0x4] sm:$0xf]
        %v349 = vld [vmem:[%s291 + $0x8] sm:$0xf]
        %v350 = vld [vmem:[%s291 + $0xc] sm:$0xf]
        %v351 = vld [vmem:[%s291 + $0x10] sm:$0xf]
        %v352 = vld [vmem:[%s291 + $0x14] sm:$0xf]
        %v353 = vld [vmem:[%s291 + $0x18] sm:$0xf]
        %v354 = vld [vmem:[%s291 + $0x1c] sm:$0xf]
        %v355 = vld [vmem:[%s300] sm:$0xf]
        %v356 = vld [vmem:[%s300 + $0x4] sm:$0xf]
        %v357 = vld [vmem:[%s300 + $0x8] sm:$0xf]
        %v358 = vld [vmem:[%s300 + $0xc] sm:$0xf]
        %v359 = vld [vmem:[%s300 + $0x10] sm:$0xf]
        %v360 = vld [vmem:[%s300 + $0x14] sm:$0xf]
        %v361 = vld [vmem:[%s300 + $0x18] sm:$0xf]
        %v362 = vld [vmem:[%s300 + $0x1c] sm:$0xf]
        %v363 = vld [vmem:[%s300 + $0x20] sm:$0xf]
        %v364 = vld [vmem:[%s300 + $0x24] sm:$0xf]
        %v365 = vld [vmem:[%s300 + $0x28] sm:$0xf]
        %v366 = vld [vmem:[%s300 + $0x2c] sm:$0xf]
        %v367 = vld [vmem:[%s300 + $0x30] sm:$0xf]
        %v368 = vld [vmem:[%s300 + $0x34] sm:$0xf]
        %v369 = vld [vmem:[%s300 + $0x38] sm:$0xf]
        %v370 = vld [vmem:[%s300 + $0x3c] sm:$0xf]
        %v371 = vld [vmem:[#allocation10] sm:$0xf]
        %v372 = vld [vmem:[#allocation10 + $0x4] sm:$0xf]
        %v373 = vld [vmem:[#allocation10 + $0x8] sm:$0xf]
        %v374 = vld [vmem:[#allocation10 + $0xc] sm:$0xf]
        %v375 = vld [vmem:[#allocation10 + $0x10] sm:$0xf]
        %v376 = vld [vmem:[#allocation10 + $0x14] sm:$0xf]
        %v377 = vld [vmem:[#allocation10 + $0x18] sm:$0xf]
        %v378 = vld [vmem:[#allocation10 + $0x1c] sm:$0xf]
        %v379 = vld [vmem:[#allocation10 + $0x20] sm:$0xf]
        %v380 = vld [vmem:[#allocation10 + $0x24] sm:$0xf]
        %v381 = vld [vmem:[#allocation10 + $0x28] sm:$0xf]
        %v382 = vld [vmem:[#allocation10 + $0x2c] sm:$0xf]
        %v383 = vld [vmem:[#allocation10 + $0x30] sm:$0xf]
        %v384 = vld [vmem:[#allocation10 + $0x34] sm:$0xf]
        %v385 = vld [vmem:[#allocation10 + $0x38] sm:$0xf]
        %v386 = vld [vmem:[#allocation10 + $0x3c] sm:$0xf]
        %v395 = vunpack.c.l.b16 %v347
        %v396 = vunpack.c.l.b16 %v348
        %v397 = vunpack.c.l.b16 %v349
        %v398 = vunpack.c.l.b16 %v350
        %v399 = vunpack.c.l.b16 %v351
        %v400 = vunpack.c.l.b16 %v352
        %v401 = vunpack.c.l.b16 %v353
        %v402 = vunpack.c.l.b16 %v354
        %v403 = vpack.c.b16 %v396, %v395
        %v404 = vpack.c.b16 %v398, %v397
        %v405 = vpack.c.b16 %v400, %v399
        %v406 = vpack.c.b16 %v402, %v401
        %v427 = vunpack.c.l.b16 %v371
        %v428 = vunpack.c.l.b16 %v372
        %v429 = vunpack.c.l.b16 %v373
        %v430 = vunpack.c.l.b16 %v374
        %v431 = vunpack.c.l.b16 %v375
        %v432 = vunpack.c.l.b16 %v376
        %v433 = vunpack.c.l.b16 %v377
        %v434 = vunpack.c.l.b16 %v378
        %v435 = vunpack.c.l.b16 %v379
        %v436 = vunpack.c.l.b16 %v380
        %v437 = vunpack.c.l.b16 %v381
        %v438 = vunpack.c.l.b16 %v382
        %v439 = vunpack.c.l.b16 %v383
        %v440 = vunpack.c.l.b16 %v384
        %v441 = vunpack.c.l.b16 %v385
        %v442 = vunpack.c.l.b16 %v386
        %v443 = vpack.c.b16 %v428, %v427
        %v444 = vpack.c.b16 %v430, %v429
        %v445 = vpack.c.b16 %v432, %v431
        %v446 = vpack.c.b16 %v434, %v433
        %v447 = vpack.c.b16 %v436, %v435
        %v448 = vpack.c.b16 %v438, %v437
        %v449 = vpack.c.b16 %v440, %v439
        %v450 = vpack.c.b16 %v442, %v441
        %459 = vmatprep.subr.bf16.mxu0 0
        %460 = vmatpush1.bf16.msra.mxu0 %v443
        %461 = vmatprep.subr.bf16.mxu0 0
        %462 = vmatpush1.bf16.msra.mxu0 %v444
        %463 = vmatprep.subr.bf16.mxu0 0
        %464 = vmatpush1.bf16.msra.mxu0 %v445
        %465 = vmatprep.subr.bf16.mxu0 0
        %466 = vmatpush1.bf16.msra.mxu0 %v446
        %467 = vmatprep.subr.bf16.mxu0 0
        %468 = vmatpush1.bf16.msra.mxu0 %v447
        %469 = vmatprep.subr.bf16.mxu0 0
        %470 = vmatpush1.bf16.msra.mxu0 %v448
        %471 = vmatprep.subr.bf16.mxu0 0
        %472 = vmatpush1.bf16.msra.mxu0 %v449
        %473 = vmatprep.subr.bf16.mxu0 0
        %474 = vmatpush1.bf16.msra.mxu0 %v450
        %475 = vmatprep.subr.bf16.mxu0 0
        %476 = vmatpush1.bf16.msra.mxu0 0
        %477 = vmatprep.subr.bf16.mxu0 0
        %478 = vmatpush1.bf16.msra.mxu0 0
        %479 = vmatprep.subr.bf16.mxu0 0
        %480 = vmatpush1.bf16.msra.mxu0 0
        %481 = vmatprep.subr.bf16.mxu0 0
        %482 = vmatpush1.bf16.msra.mxu0 0
        %483 = vmatprep.subr.bf16.mxu0 0
        %484 = vmatpush1.bf16.msra.mxu0 0
        %485 = vmatprep.subr.bf16.mxu0 0
        %486 = vmatpush1.bf16.msra.mxu0 0
        %487 = vmatprep.subr.bf16.mxu0 0
        %488 = vmatpush1.bf16.msra.mxu0 0
        %489 = vmatprep.subr.bf16.mxu0 0
        %490 = vmatpush1.bf16.msra.mxu0 0
        %491 = vmatprep.mubr.bf16.mxu0 0
        %492 = vmatmul.mubr.bf16.gmra.mrb[0].mxu0 %v403
        %v493 = vpop.f32.mrb[0].mxu0
        %v494 = vadd.f32 0.0, %v493
        %v495 = vpop.f32.mrb[0].mxu0
        %v496 = vpop.f32.mrb[0].mxu0
        %v497 = vadd.f32 0.0, %v496
        %v498 = vpop.f32.mrb[0].mxu0
        %499 = vmatprep.mubr.bf16.mxu0 0
        %500 = vmatmul.mubr.bf16.gmra.mrb[0].mxu0 %v404
        %v501 = vpop.f32.mrb[0].mxu0
        %v502 = vadd.f32 0.0, %v501
        %v503 = vpop.f32.mrb[0].mxu0
        %v504 = vpop.f32.mrb[0].mxu0
        %v505 = vadd.f32 0.0, %v504
        %v506 = vpop.f32.mrb[0].mxu0
        %507 = vmatprep.mubr.bf16.mxu0 0
        %508 = vmatmul.mubr.bf16.gmra.mrb[0].mxu0 %v405
        %v509 = vpop.f32.mrb[0].mxu0
        %v510 = vadd.f32 0.0, %v509
        %v511 = vpop.f32.mrb[0].mxu0
        %v512 = vpop.f32.mrb[0].mxu0
        %v513 = vadd.f32 0.0, %v512
        %v514 = vpop.f32.mrb[0].mxu0
        %515 = vmatprep.mubr.bf16.mxu0 0
        %516 = vmatmul.mubr.bf16.gmra.mrb[0].mxu0 %v406
        %v517 = vpop.f32.mrb[0].mxu0
        %v518 = vadd.f32 0.0, %v517
        %v519 = vpop.f32.mrb[0].mxu0
        %v520 = vpop.f32.mrb[0].mxu0
        %v521 = vadd.f32 0.0, %v520
        %v522 = vpop.f32.mrb[0].mxu0
        %523 = vdwg.mxu0
        %v524 = vpack.c.bf16 %v497, %v494
        %v525 = vpack.c.bf16 %v505, %v502
        %v526 = vpack.c.bf16 %v513, %v510
        %v527 = vpack.c.bf16 %v521, %v518
        %528 = vst [vmem:[#allocation2] sm:$0xff] %v524
        %529 = vst [vmem:[#allocation2 + $0x8] sm:$0xff] %v525
        %530 = vst [vmem:[#allocation2 + $0x10] sm:$0xff] %v526
        %531 = vst [vmem:[#allocation2 + $0x18] sm:$0xff] %v527
        %v532 = vld [vmem:[#allocation11] sm:$0xff]
        %v533 = vld [vmem:[#allocation11 + $0x8] sm:$0xff]
        %v534 = vld [vmem:[#allocation11 + $0x10] sm:$0xff]
        %v535 = vld [vmem:[#allocation11 + $0x18] sm:$0xff]
        %v536 = vld [vmem:[#allocation11 + $0x20] sm:$0xff]
        %v537 = vld [vmem:[#allocation11 + $0x28] sm:$0xff]
        %v538 = vld [vmem:[#allocation11 + $0x30] sm:$0xff]
        %v539 = vld [vmem:[#allocation11 + $0x38] sm:$0xff]
        %v540 = vld [vmem:[#allocation11 + $0x40] sm:$0xff]
        %v541 = vld [vmem:[#allocation11 + $0x48] sm:$0xff]
        %v542 = vld [vmem:[#allocation11 + $0x50] sm:$0xff]
        %v543 = vld [vmem:[#allocation11 + $0x58] sm:$0xff]
        %v544 = vld [vmem:[#allocation11 + $0x60] sm:$0xff]
        %v545 = vld [vmem:[#allocation11 + $0x68] sm:$0xff]
        %v546 = vld [vmem:[#allocation11 + $0x70] sm:$0xff]
        %v547 = vld [vmem:[#allocation11 + $0x78] sm:$0xff]
        %v564 = vunpack.c.l.b16 %v355
        %v565 = vunpack.c.l.b16 %v356
        %v566 = vunpack.c.l.b16 %v357
        %v567 = vunpack.c.l.b16 %v358
        %v568 = vunpack.c.l.b16 %v359
        %v569 = vunpack.c.l.b16 %v360
        %v570 = vunpack.c.l.b16 %v361
        %v571 = vunpack.c.l.b16 %v362
        %v572 = vunpack.c.l.b16 %v363
        %v573 = vunpack.c.l.b16 %v364
        %v574 = vunpack.c.l.b16 %v365
        %v575 = vunpack.c.l.b16 %v366
        %v576 = vunpack.c.l.b16 %v367
        %v577 = vunpack.c.l.b16 %v368
        %v578 = vunpack.c.l.b16 %v369
        %v579 = vunpack.c.l.b16 %v370
        %v580 = vpack.c.b16 %v565, %v564
        %v581 = vpack.c.b16 %v567, %v566
        %v582 = vpack.c.b16 %v569, %v568
        %v583 = vpack.c.b16 %v571, %v570
        %v584 = vpack.c.b16 %v573, %v572
        %v585 = vpack.c.b16 %v575, %v574
        %v586 = vpack.c.b16 %v577, %v576
        %v587 = vpack.c.b16 %v579, %v578
        %v612 = vunpack.c.l.b16 %v532
        %v613 = vunpack.c.h.b16 %v532
        %v614 = vunpack.c.l.b16 %v533
        %v615 = vunpack.c.h.b16 %v533
        %v616 = vunpack.c.l.b16 %v534
        %v617 = vunpack.c.h.b16 %v534
        %v618 = vunpack.c.l.b16 %v535
        %v619 = vunpack.c.h.b16 %v535
        %v620 = vunpack.c.l.b16 %v536
        %v621 = vunpack.c.h.b16 %v536
        %v622 = vunpack.c.l.b16 %v537
        %v623 = vunpack.c.h.b16 %v537
        %v624 = vunpack.c.l.b16 %v538
        %v625 = vunpack.c.h.b16 %v538
        %v626 = vunpack.c.l.b16 %v539
        %v627 = vunpack.c.h.b16 %v539
        %v628 = vunpack.c.l.b16 %v540
        %v629 = vunpack.c.h.b16 %v540
        %v630 = vunpack.c.l.b16 %v541
        %v631 = vunpack.c.h.b16 %v541
        %v632 = vunpack.c.l.b16 %v542
        %v633 = vunpack.c.h.b16 %v542
        %v634 = vunpack.c.l.b16 %v543
        %v635 = vunpack.c.h.b16 %v543
        %v636 = vunpack.c.l.b16 %v544
        %v637 = vunpack.c.h.b16 %v544
        %v638 = vunpack.c.l.b16 %v545
        %v639 = vunpack.c.h.b16 %v545
        %v640 = vunpack.c.l.b16 %v546
        %v641 = vunpack.c.h.b16 %v546
        %v642 = vunpack.c.l.b16 %v547
        %v643 = vunpack.c.h.b16 %v547
        %v644 = vpack.c.b16 %v614, %v612
        %v645 = vpack.c.b16 %v615, %v613
        %v646 = vpack.c.b16 %v618, %v616
        %v647 = vpack.c.b16 %v619, %v617
        %v648 = vpack.c.b16 %v622, %v620
        %v649 = vpack.c.b16 %v623, %v621
        %v650 = vpack.c.b16 %v626, %v624
        %v651 = vpack.c.b16 %v627, %v625
        %v652 = vpack.c.b16 %v630, %v628
        %v653 = vpack.c.b16 %v631, %v629
        %v654 = vpack.c.b16 %v634, %v632
        %v655 = vpack.c.b16 %v635, %v633
        %v656 = vpack.c.b16 %v638, %v636
        %v657 = vpack.c.b16 %v639, %v637
        %v658 = vpack.c.b16 %v642, %v640
        %v659 = vpack.c.b16 %v643, %v641
        %676 = vmatprep.subr.bf16.mxu0 %v645
        %677 = vmatpush1.bf16.msra.mxu0 %v644
        %678 = vmatprep.subr.bf16.mxu0 %v647
        %679 = vmatpush1.bf16.msra.mxu0 %v646
        %680 = vmatprep.subr.bf16.mxu0 %v649
        %681 = vmatpush1.bf16.msra.mxu0 %v648
        %682 = vmatprep.subr.bf16.mxu0 %v651
        %683 = vmatpush1.bf16.msra.mxu0 %v650
        %684 = vmatprep.subr.bf16.mxu0 %v653
        %685 = vmatpush1.bf16.msra.mxu0 %v652
        %686 = vmatprep.subr.bf16.mxu0 %v655
        %687 = vmatpush1.bf16.msra.mxu0 %v654
        %688 = vmatprep.subr.bf16.mxu0 %v657
        %689 = vmatpush1.bf16.msra.mxu0 %v656
        %690 = vmatprep.subr.bf16.mxu0 %v659
        %691 = vmatpush1.bf16.msra.mxu0 %v658
        %692 = vmatprep.subr.bf16.mxu0 0
        %693 = vmatpush1.bf16.msra.mxu0 0
        %694 = vmatprep.subr.bf16.mxu0 0
        %695 = vmatpush1.bf16.msra.mxu0 0
        %696 = vmatprep.subr.bf16.mxu0 0
        %697 = vmatpush1.bf16.msra.mxu0 0
        %698 = vmatprep.subr.bf16.mxu0 0
        %699 = vmatpush1.bf16.msra.mxu0 0
        %700 = vmatprep.subr.bf16.mxu0 0
        %701 = vmatpush1.bf16.msra.mxu0 0
        %702 = vmatprep.subr.bf16.mxu0 0
        %703 = vmatpush1.bf16.msra.mxu0 0
        %704 = vmatprep.subr.bf16.mxu0 0
        %705 = vmatpush1.bf16.msra.mxu0 0
        %706 = vmatprep.subr.bf16.mxu0 0
        %707 = vmatpush1.bf16.msra.mxu0 0
        %708 = vmatprep.mubr.bf16.mxu0 0
        %709 = vmatmul.mubr.bf16.gmra.mrb[0].mxu0 %v580
        %v710 = vpop.f32.mrb[0].mxu0
        %v711 = vadd.f32 0.0, %v710
        %v712 = vpop.f32.mrb[0].mxu0
        %v713 = vadd.f32 0.0, %v712
        %v714 = vpop.f32.mrb[0].mxu0
        %v715 = vadd.f32 0.0, %v714
        %v716 = vpop.f32.mrb[0].mxu0
        %v717 = vadd.f32 0.0, %v716
        %718 = vmatprep.mubr.bf16.mxu0 0
        %719 = vmatmul.mubr.bf16.gmra.mrb[0].mxu0 %v581
        %v720 = vpop.f32.mrb[0].mxu0
        %v721 = vadd.f32 0.0, %v720
        %v722 = vpop.f32.mrb[0].mxu0
        %v723 = vadd.f32 0.0, %v722
        %v724 = vpop.f32.mrb[0].mxu0
        %v725 = vadd.f32 0.0, %v724
        %v726 = vpop.f32.mrb[0].mxu0
        %v727 = vadd.f32 0.0, %v726
        %728 = vmatprep.mubr.bf16.mxu0 0
        %729 = vmatmul.mubr.bf16.gmra.mrb[0].mxu0 %v582
        %v730 = vpop.f32.mrb[0].mxu0
        %v731 = vadd.f32 0.0, %v730
        %v732 = vpop.f32.mrb[0].mxu0
        %v733 = vadd.f32 0.0, %v732
        %v734 = vpop.f32.mrb[0].mxu0
        %v735 = vadd.f32 0.0, %v734
        %v736 = vpop.f32.mrb[0].mxu0
        %v737 = vadd.f32 0.0, %v736
        %738 = vmatprep.mubr.bf16.mxu0 0
        %739 = vmatmul.mubr.bf16.gmra.mrb[0].mxu0 %v583
        %v740 = vpop.f32.mrb[0].mxu0
        %v741 = vadd.f32 0.0, %v740
        %v742 = vpop.f32.mrb[0].mxu0
        %v743 = vadd.f32 0.0, %v742
        %v744 = vpop.f32.mrb[0].mxu0
        %v745 = vadd.f32 0.0, %v744
        %v746 = vpop.f32.mrb[0].mxu0
        %v747 = vadd.f32 0.0, %v746
        %748 = vmatprep.mubr.bf16.mxu0 0
        %749 = vmatmul.mubr.bf16.gmra.mrb[0].mxu0 %v584
        %v750 = vpop.f32.mrb[0].mxu0
        %v751 = vadd.f32 0.0, %v750
        %v752 = vpop.f32.mrb[0].mxu0
        %v753 = vadd.f32 0.0, %v752
        %v754 = vpop.f32.mrb[0].mxu0
        %v755 = vadd.f32 0.0, %v754
        %v756 = vpop.f32.mrb[0].mxu0
        %v757 = vadd.f32 0.0, %v756
        %758 = vmatprep.mubr.bf16.mxu0 0
        %759 = vmatmul.mubr.bf16.gmra.mrb[0].mxu0 %v585
        %v760 = vpop.f32.mrb[0].mxu0
        %v761 = vadd.f32 0.0, %v760
        %v762 = vpop.f32.mrb[0].mxu0
        %v763 = vadd.f32 0.0, %v762
        %v764 = vpop.f32.mrb[0].mxu0
        %v765 = vadd.f32 0.0, %v764
        %v766 = vpop.f32.mrb[0].mxu0
        %v767 = vadd.f32 0.0, %v766
        %768 = vmatprep.mubr.bf16.mxu0 0
        %769 = vmatmul.mubr.bf16.gmra.mrb[0].mxu0 %v586
        %v770 = vpop.f32.mrb[0].mxu0
        %v771 = vadd.f32 0.0, %v770
        %v772 = vpop.f32.mrb[0].mxu0
        %v773 = vadd.f32 0.0, %v772
        %v774 = vpop.f32.mrb[0].mxu0
        %v775 = vadd.f32 0.0, %v774
        %v776 = vpop.f32.mrb[0].mxu0
        %v777 = vadd.f32 0.0, %v776
        %778 = vmatprep.mubr.bf16.mxu0 0
        %779 = vmatmul.mubr.bf16.gmra.mrb[0].mxu0 %v587
        %v780 = vpop.f32.mrb[0].mxu0
        %v781 = vadd.f32 0.0, %v780
        %v782 = vpop.f32.mrb[0].mxu0
        %v783 = vadd.f32 0.0, %v782
        %v784 = vpop.f32.mrb[0].mxu0
        %v785 = vadd.f32 0.0, %v784
        %v786 = vpop.f32.mrb[0].mxu0
        %v787 = vadd.f32 0.0, %v786
        %788 = vdwg.mxu0
        %v789 = vpack.c.bf16 %v715, %v711
        %v790 = vpack.c.bf16 %v717, %v713
        %v791 = vpack.c.bf16 %v725, %v721
        %v792 = vpack.c.bf16 %v727, %v723
        %v793 = vpack.c.bf16 %v735, %v731
        %v794 = vpack.c.bf16 %v737, %v733
        %v795 = vpack.c.bf16 %v745, %v741
        %v796 = vpack.c.bf16 %v747, %v743
        %v797 = vpack.c.bf16 %v755, %v751
        %v798 = vpack.c.bf16 %v757, %v753
        %v799 = vpack.c.bf16 %v765, %v761
        %v800 = vpack.c.bf16 %v767, %v763
        %v801 = vpack.c.bf16 %v775, %v771
        %v802 = vpack.c.bf16 %v777, %v773
        %v803 = vpack.c.bf16 %v785, %v781
        %v804 = vpack.c.bf16 %v787, %v783
        %805 = vst [vmem:[#allocation3] sm:$0xff] %v789
        %806 = vst [vmem:[#allocation3 + $0x8] sm:$0xff] %v790
        %807 = vst [vmem:[#allocation3 + $0x10] sm:$0xff] %v791
        %808 = vst [vmem:[#allocation3 + $0x18] sm:$0xff] %v792
        %809 = vst [vmem:[#allocation3 + $0x20] sm:$0xff] %v793
        %810 = vst [vmem:[#allocation3 + $0x28] sm:$0xff] %v794
        %811 = vst [vmem:[#allocation3 + $0x30] sm:$0xff] %v795
        %812 = vst [vmem:[#allocation3 + $0x38] sm:$0xff] %v796
        %813 = vst [vmem:[#allocation3 + $0x40] sm:$0xff] %v797
        %814 = vst [vmem:[#allocation3 + $0x48] sm:$0xff] %v798
        %815 = vst [vmem:[#allocation3 + $0x50] sm:$0xff] %v799
        %816 = vst [vmem:[#allocation3 + $0x58] sm:$0xff] %v800
        %817 = vst [vmem:[#allocation3 + $0x60] sm:$0xff] %v801
        %818 = vst [vmem:[#allocation3 + $0x68] sm:$0xff] %v802
        %819 = vst [vmem:[#allocation3 + $0x70] sm:$0xff] %v803
        %820 = vst [vmem:[#allocation3 + $0x78] sm:$0xff] %v804
        %s821 = smul.u32 %s31, 64
        %v822 = vlaneseq
        %v823 = vshrl.u32 %v822, 7
        %v824 = vadd.s32 %v823, 8
        %v825 = vadd.s32 %v823, 16
        %v826 = vadd.s32 %v823, 24
        %v827 = vadd.s32 %v823, 32
        %v828 = vadd.s32 %v823, 40
        %v829 = vadd.s32 %v823, 48
        %v830 = vadd.s32 %v823, 56
        %v831 = vstv %s821
        %v832 = vadd.s32 %v823, %v831
        %v833 = vadd.s32 %v824, %v831
        %v834 = vadd.s32 %v825, %v831
        %v835 = vadd.s32 %v826, %v831
        %v836 = vadd.s32 %v827, %v831
        %v837 = vadd.s32 %v828, %v831
        %v838 = vadd.s32 %v829, %v831
        %v839 = vadd.s32 %v830, %v831
        %v840 = vlaneseq
        %v841 = vand.u32 %v840, 127
        %vm842 = vcmp.le.s32.totalorder %v841, %v832
        %vm843 = vcmp.le.s32.totalorder %v841, %v833
        %vm844 = vcmp.le.s32.totalorder %v841, %v834
        %vm845 = vcmp.le.s32.totalorder %v841, %v835
        %vm846 = vcmp.le.s32.totalorder %v841, %v836
        %vm847 = vcmp.le.s32.totalorder %v841, %v837
        %vm848 = vcmp.le.s32.totalorder %v841, %v838
        %vm849 = vcmp.le.s32.totalorder %v841, %v839
        %v850 = vsel %vm842, 0.0, -1e+30
        %v851 = vsel %vm843, 0.0, -1e+30
        %v852 = vsel %vm844, 0.0, -1e+30
        %v853 = vsel %vm845, 0.0, -1e+30
        %v854 = vsel %vm846, 0.0, -1e+30
        %v855 = vsel %vm847, 0.0, -1e+30
        %v856 = vsel %vm848, 0.0, -1e+30
        %v857 = vsel %vm849, 0.0, -1e+30
        %v858 = vld [vmem:[#allocation2] sm:$0xff]
        %v859 = vld [vmem:[#allocation2 + $0x8] sm:$0xff]
        %v860 = vld [vmem:[#allocation2 + $0x10] sm:$0xff]
        %v861 = vld [vmem:[#allocation2 + $0x18] sm:$0xff]
        %v862 = vld [vmem:[#allocation3] sm:$0xff]
        %v863 = vld [vmem:[#allocation3 + $0x10] sm:$0xff]
        %v864 = vld [vmem:[#allocation3 + $0x20] sm:$0xff]
        %v865 = vld [vmem:[#allocation3 + $0x30] sm:$0xff]
        %v866 = vld [vmem:[#allocation3 + $0x40] sm:$0xff]
        %v867 = vld [vmem:[#allocation3 + $0x50] sm:$0xff]
        %v868 = vld [vmem:[#allocation3 + $0x60] sm:$0xff]
        %v869 = vld [vmem:[#allocation3 + $0x70] sm:$0xff]
        %v870 = vld [vmem:[#allocation3 + $0x8] sm:$0xff]
        %v871 = vld [vmem:[#allocation3 + $0x18] sm:$0xff]
        %v872 = vld [vmem:[#allocation3 + $0x28] sm:$0xff]
        %v873 = vld [vmem:[#allocation3 + $0x38] sm:$0xff]
        %v874 = vld [vmem:[#allocation3 + $0x48] sm:$0xff]
        %v875 = vld [vmem:[#allocation3 + $0x58] sm:$0xff]
        %v876 = vld [vmem:[#allocation3 + $0x68] sm:$0xff]
        %v877 = vld [vmem:[#allocation3 + $0x78] sm:$0xff]
        %vm878 = vcmask 261120
        %v880 = vsel %vm878, %v858, 0
        %v883 = vsel %vm878, %v859, 0
        %v886 = vsel %vm878, %v860, 0
        %v889 = vsel %vm878, %v861, 0
        %v892 = vsel %vm878, %v862, 0
        %v895 = vsel %vm878, %v863, 0
        %v898 = vsel %vm878, %v864, 0
        %v901 = vsel %vm878, %v865, 0
        %v904 = vsel %vm878, %v866, 0
        %v907 = vsel %vm878, %v867, 0
        %v910 = vsel %vm878, %v868, 0
        %v913 = vsel %vm878, %v869, 0
        %915 = vmatprep.subr.bf16.mxu0 0
        %916 = vmatpush1.bf16.xpose.msra.mxu0 %v892
        %917 = vmatprep.subr.bf16.mxu0 0
        %918 = vmatpush1.bf16.xpose.msra.mxu0 %v895
        %919 = vmatprep.subr.bf16.mxu0 0
        %920 = vmatpush1.bf16.xpose.msra.mxu0 %v898
        %921 = vmatprep.subr.bf16.mxu0 0
        %922 = vmatpush1.bf16.xpose.msra.mxu0 %v901
        %923 = vmatprep.subr.bf16.mxu0 0
        %924 = vmatpush1.bf16.xpose.msra.mxu0 %v904
        %925 = vmatprep.subr.bf16.mxu0 0
        %926 = vmatpush1.bf16.xpose.msra.mxu0 %v907
        %927 = vmatprep.subr.bf16.mxu0 0
        %928 = vmatpush1.bf16.xpose.msra.mxu0 %v910
        %929 = vmatprep.subr.bf16.mxu0 0
        %930 = vmatpush1.bf16.xpose.msra.mxu0 %v913
        %931 = vmatprep.subr.bf16.mxu0 0
        %932 = vmatpush1.bf16.xpose.msra.mxu0 0
        %933 = vmatprep.subr.bf16.mxu0 0
        %934 = vmatpush1.bf16.xpose.msra.mxu0 0
        %935 = vmatprep.subr.bf16.mxu0 0
        %936 = vmatpush1.bf16.xpose.msra.mxu0 0
        %937 = vmatprep.subr.bf16.mxu0 0
        %938 = vmatpush1.bf16.xpose.msra.mxu0 0
        %939 = vmatprep.subr.bf16.mxu0 0
        %940 = vmatpush1.bf16.xpose.msra.mxu0 0
        %941 = vmatprep.subr.bf16.mxu0 0
        %942 = vmatpush1.bf16.xpose.msra.mxu0 0
        %943 = vmatprep.subr.bf16.mxu0 0
        %944 = vmatpush1.bf16.xpose.msra.mxu0 0
        %945 = vmatprep.subr.bf16.mxu0 0
        %946 = vmatpush1.bf16.xpose.msra.mxu0 0
        %947 = vmatprep.mubr.bf16.mxu0 0
        %948 = vmatmul.mubr.bf16.gmra.mrb[0].mxu0 %v880
        %v949 = vpop.f32.mrb[0].mxu0
        %v950 = vadd.f32 %v850, %v949
        %v951 = vpop.f32.mrb[0].mxu0
        %v952 = vpop.f32.mrb[0].mxu0
        %v953 = vadd.f32 %v851, %v952
        %v954 = vpop.f32.mrb[0].mxu0
        %955 = vmatprep.mubr.bf16.mxu0 0
        %956 = vmatmul.mubr.bf16.gmra.mrb[0].mxu0 %v883
        %v957 = vpop.f32.mrb[0].mxu0
        %v958 = vadd.f32 %v852, %v957
        %v959 = vpop.f32.mrb[0].mxu0
        %v960 = vpop.f32.mrb[0].mxu0
        %v961 = vadd.f32 %v853, %v960
        %v962 = vpop.f32.mrb[0].mxu0
        %963 = vmatprep.mubr.bf16.mxu0 0
        %964 = vmatmul.mubr.bf16.gmra.mrb[0].mxu0 %v886
        %v965 = vpop.f32.mrb[0].mxu0
        %v966 = vadd.f32 %v854, %v965
        %v967 = vpop.f32.mrb[0].mxu0
        %v968 = vpop.f32.mrb[0].mxu0
        %v969 = vadd.f32 %v855, %v968
        %v970 = vpop.f32.mrb[0].mxu0
        %971 = vmatprep.mubr.bf16.mxu0 0
        %972 = vmatmul.mubr.bf16.gmra.mrb[0].mxu0 %v889
        %v973 = vpop.f32.mrb[0].mxu0
        %v974 = vadd.f32 %v856, %v973
        %v975 = vpop.f32.mrb[0].mxu0
        %v976 = vpop.f32.mrb[0].mxu0
        %v977 = vadd.f32 %v857, %v976
        %v978 = vpop.f32.mrb[0].mxu0
        %979 = vdwg.mxu0
        %980 = vmax.xlane.f32.xlu0 %v950
        %v981 = vpop.xlane.xlu0 %980
        %982 = vmax.xlane.f32.xlu0 %v953
        %v983 = vpop.xlane.xlu0 %982
        %984 = vmax.xlane.f32.xlu0 %v958
        %v985 = vpop.xlane.xlu0 %984
        %986 = vmax.xlane.f32.xlu0 %v961
        %v987 = vpop.xlane.xlu0 %986
        %988 = vmax.xlane.f32.xlu0 %v966
        %v989 = vpop.xlane.xlu0 %988
        %990 = vmax.xlane.f32.xlu0 %v969
        %v991 = vpop.xlane.xlu0 %990
        %992 = vmax.xlane.f32.xlu0 %v974
        %v993 = vpop.xlane.xlu0 %992
        %994 = vmax.xlane.f32.xlu0 %v977
        %v995 = vpop.xlane.xlu0 %994
        %v996 = vsub.f32 %v950, %v981
        %v997 = vsub.f32 %v953, %v983
        %v998 = vsub.f32 %v958, %v985
        %v999 = vsub.f32 %v961, %v987
        %v1000 = vsub.f32 %v966, %v989
        %v1001 = vsub.f32 %v969, %v991
        %v1002 = vsub.f32 %v974, %v993
        %v1003 = vsub.f32 %v977, %v995
        %v1004 = vmul.f32 %v996, 1.442695
        %v1005 = vpow.pop %v1004
        %v1006 = vmul.f32 %v997, 1.442695
        %v1007 = vpow.pop %v1006
        %v1008 = vmul.f32 %v998, 1.442695
        %v1009 = vpow.pop %v1008
        %v1010 = vmul.f32 %v999, 1.442695
        %v1011 = vpow.pop %v1010
        %v1012 = vmul.f32 %v1000, 1.442695
        %v1013 = vpow.pop %v1012
        %v1014 = vmul.f32 %v1001, 1.442695
        %v1015 = vpow.pop %v1014
        %v1016 = vmul.f32 %v1002, 1.442695
        %v1017 = vpow.pop %v1016
        %v1018 = vmul.f32 %v1003, 1.442695
        %v1019 = vpow.pop %v1018
        %1020 = vadd.xlane.f32.xlu0 %v1005
        %v1021 = vpop.xlane.xlu0 %1020
        %1022 = vadd.xlane.f32.xlu0 %v1007
        %v1023 = vpop.xlane.xlu0 %1022
        %1024 = vadd.xlane.f32.xlu0 %v1009
        %v1025 = vpop.xlane.xlu0 %1024
        %1026 = vadd.xlane.f32.xlu0 %v1011
        %v1027 = vpop.xlane.xlu0 %1026
        %1028 = vadd.xlane.f32.xlu0 %v1013
        %v1029 = vpop.xlane.xlu0 %1028
        %1030 = vadd.xlane.f32.xlu0 %v1015
        %v1031 = vpop.xlane.xlu0 %1030
        %1032 = vadd.xlane.f32.xlu0 %v1017
        %v1033 = vpop.xlane.xlu0 %1032
        %1034 = vadd.xlane.f32.xlu0 %v1019
        %v1035 = vpop.xlane.xlu0 %1034
        %v1036 = vrcp.pop %v1021
        %v1037 = vrcp.pop %v1023
        %v1038 = vrcp.pop %v1025
        %v1039 = vrcp.pop %v1027
        %v1040 = vrcp.pop %v1029
        %v1041 = vrcp.pop %v1031
        %v1042 = vrcp.pop %v1033
        %v1043 = vrcp.pop %v1035
        %v1044 = vmul.f32 %v1005, %v1036
        %v1045 = vmul.f32 %v1007, %v1037
        %v1046 = vmul.f32 %v1009, %v1038
        %v1047 = vmul.f32 %v1011, %v1039
        %v1048 = vmul.f32 %v1013, %v1040
        %v1049 = vmul.f32 %v1015, %v1041
        %v1050 = vmul.f32 %v1017, %v1042
        %v1051 = vmul.f32 %v1019, %v1043
        %v1052 = vpack.c.bf16 %v1045, %v1044
        %v1053 = vpack.c.bf16 %v1047, %v1046
        %v1054 = vpack.c.bf16 %v1049, %v1048
        %v1055 = vpack.c.bf16 %v1051, %v1050
        %1056 = vmatprep.subr.bf16.mxu0 0
        %1057 = vmatpush1.bf16.msra.mxu0 %v870
        %1058 = vmatprep.subr.bf16.mxu0 0
        %1059 = vmatpush1.bf16.msra.mxu0 %v871
        %1060 = vmatprep.subr.bf16.mxu0 0
        %1061 = vmatpush1.bf16.msra.mxu0 %v872
        %1062 = vmatprep.subr.bf16.mxu0 0
        %1063 = vmatpush1.bf16.msra.mxu0 %v873
        %1064 = vmatprep.subr.bf16.mxu0 0
        %1065 = vmatpush1.bf16.msra.mxu0 %v874
        %1066 = vmatprep.subr.bf16.mxu0 0
        %1067 = vmatpush1.bf16.msra.mxu0 %v875
        %1068 = vmatprep.subr.bf16.mxu0 0
        %1069 = vmatpush1.bf16.msra.mxu0 %v876
        %1070 = vmatprep.subr.bf16.mxu0 0
        %1071 = vmatpush1.bf16.msra.mxu0 %v877
        %1072 = vmatprep.subr.bf16.mxu0 0
        %1073 = vmatpush1.bf16.msra.mxu0 0
        %1074 = vmatprep.subr.bf16.mxu0 0
        %1075 = vmatpush1.bf16.msra.mxu0 0
        %1076 = vmatprep.subr.bf16.mxu0 0
        %1077 = vmatpush1.bf16.msra.mxu0 0
        %1078 = vmatprep.subr.bf16.mxu0 0
        %1079 = vmatpush1.bf16.msra.mxu0 0
        %1080 = vmatprep.subr.bf16.mxu0 0
        %1081 = vmatpush1.bf16.msra.mxu0 0
        %1082 = vmatprep.subr.bf16.mxu0 0
        %1083 = vmatpush1.bf16.msra.mxu0 0
        %1084 = vmatprep.subr.bf16.mxu0 0
        %1085 = vmatpush1.bf16.msra.mxu0 0
        %1086 = vmatprep.subr.bf16.mxu0 0
        %1087 = vmatpush1.bf16.msra.mxu0 0
        %1088 = vmatprep.mubr.bf16.mxu0 0
        %1089 = vmatmul.mubr.bf16.gmra.mrb[0].mxu0 %v1052
        %v1090 = vpop.f32.mrb[0].mxu0
        %v1091 = vadd.f32 0.0, %v1090
        %v1092 = vpop.f32.mrb[0].mxu0
        %v1093 = vpop.f32.mrb[0].mxu0
        %v1094 = vadd.f32 0.0, %v1093
        %v1095 = vpop.f32.mrb[0].mxu0
        %1096 = vmatprep.mubr.bf16.mxu0 0
        %1097 = vmatmul.mubr.bf16.gmra.mrb[0].mxu0 %v1053
        %v1098 = vpop.f32.mrb[0].mxu0
        %v1099 = vadd.f32 0.0, %v1098
        %v1100 = vpop.f32.mrb[0].mxu0
        %v1101 = vpop.f32.mrb[0].mxu0
        %v1102 = vadd.f32 0.0, %v1101
        %v1103 = vpop.f32.mrb[0].mxu0
        %1104 = vmatprep.mubr.bf16.mxu0 0
        %1105 = vmatmul.mubr.bf16.gmra.mrb[0].mxu0 %v1054
        %v1106 = vpop.f32.mrb[0].mxu0
        %v1107 = vadd.f32 0.0, %v1106
        %v1108 = vpop.f32.mrb[0].mxu0
        %v1109 = vpop.f32.mrb[0].mxu0
        %v1110 = vadd.f32 0.0, %v1109
        %v1111 = vpop.f32.mrb[0].mxu0
        %1112 = vmatprep.mubr.bf16.mxu0 0
        %1113 = vmatmul.mubr.bf16.gmra.mrb[0].mxu0 %v1055
        %v1114 = vpop.f32.mrb[0].mxu0
        %v1115 = vadd.f32 0.0, %v1114
        %v1116 = vpop.f32.mrb[0].mxu0
        %v1117 = vpop.f32.mrb[0].mxu0
        %v1118 = vadd.f32 0.0, %v1117
        %v1119 = vpop.f32.mrb[0].mxu0
        %1120 = vdwg.mxu0
        %v1121 = vpack.c.bf16 %v1094, %v1091
        %v1122 = vpack.c.bf16 %v1102, %v1099
        %v1123 = vpack.c.bf16 %v1110, %v1107
        %v1124 = vpack.c.bf16 %v1118, %v1115
        %1125 = vst.msk [vmem:[#allocation4] sm:$0xff] %vm878, %v1121
        %1126 = vst.msk [vmem:[#allocation4 + $0x8] sm:$0xff] %vm878, %v1122
        %1127 = vst.msk [vmem:[#allocation4 + $0x10] sm:$0xff] %vm878, %v1123
        %1128 = vst.msk [vmem:[#allocation4 + $0x18] sm:$0xff] %vm878, %v1124
        %v1129 = vld [vmem:[#allocation2] sm:$0xff]
        %v1130 = vld [vmem:[#allocation2 + $0x8] sm:$0xff]
        %v1131 = vld [vmem:[#allocation2 + $0x10] sm:$0xff]
        %v1132 = vld [vmem:[#allocation2 + $0x18] sm:$0xff]
        %v1133 = vld [vmem:[#allocation3] sm:$0xff]
        %v1134 = vld [vmem:[#allocation3 + $0x10] sm:$0xff]
        %v1135 = vld [vmem:[#allocation3 + $0x20] sm:$0xff]
        %v1136 = vld [vmem:[#allocation3 + $0x30] sm:$0xff]
        %v1137 = vld [vmem:[#allocation3 + $0x40] sm:$0xff]
        %v1138 = vld [vmem:[#allocation3 + $0x50] sm:$0xff]
        %v1139 = vld [vmem:[#allocation3 + $0x60] sm:$0xff]
        %v1140 = vld [vmem:[#allocation3 + $0x70] sm:$0xff]
        %v1141 = vld [vmem:[#allocation3 + $0x8] sm:$0xff]
        %v1142 = vld [vmem:[#allocation3 + $0x18] sm:$0xff]
        %v1143 = vld [vmem:[#allocation3 + $0x28] sm:$0xff]
        %v1144 = vld [vmem:[#allocation3 + $0x38] sm:$0xff]
        %v1145 = vld [vmem:[#allocation3 + $0x48] sm:$0xff]
        %v1146 = vld [vmem:[#allocation3 + $0x58] sm:$0xff]
        %v1147 = vld [vmem:[#allocation3 + $0x68] sm:$0xff]
        %v1148 = vld [vmem:[#allocation3 + $0x78] sm:$0xff]
        %1153 = vrot.lane.b32.xlu0 %v1129, 96
        %v1154 = vpop.permute.xlu0 %1153
        %1155 = vrot.lane.b32.xlu0 %v1130, 96
        %v1156 = vpop.permute.xlu0 %1155
        %1157 = vrot.lane.b32.xlu0 %v1131, 96
        %v1158 = vpop.permute.xlu0 %1157
        %1159 = vrot.lane.b32.xlu0 %v1132, 96
        %v1160 = vpop.permute.xlu0 %1159
        %1169 = vrot.lane.b32.xlu0 %v1133, 96
        %v1170 = vpop.permute.xlu0 %1169
        %1171 = vrot.lane.b32.xlu0 %v1134, 96
        %v1172 = vpop.permute.xlu0 %1171
        %1173 = vrot.lane.b32.xlu0 %v1135, 96
        %v1174 = vpop.permute.xlu0 %1173
        %1175 = vrot.lane.b32.xlu0 %v1136, 96
        %v1176 = vpop.permute.xlu0 %1175
        %1177 = vrot.lane.b32.xlu0 %v1137, 96
        %v1178 = vpop.permute.xlu0 %1177
        %1179 = vrot.lane.b32.xlu0 %v1138, 96
        %v1180 = vpop.permute.xlu0 %1179
        %1181 = vrot.lane.b32.xlu0 %v1139, 96
        %v1182 = vpop.permute.xlu0 %1181
        %1183 = vrot.lane.b32.xlu0 %v1140, 96
        %v1184 = vpop.permute.xlu0 %1183
        %v1186 = vsel %vm878, %v1154, 0
        %v1189 = vsel %vm878, %v1156, 0
        %v1192 = vsel %vm878, %v1158, 0
        %v1195 = vsel %vm878, %v1160, 0
        %v1198 = vsel %vm878, %v1170, 0
        %v1201 = vsel %vm878, %v1172, 0
        %v1204 = vsel %vm878, %v1174, 0
        %v1207 = vsel %vm878, %v1176, 0
        %v1210 = vsel %vm878, %v1178, 0
        %v1213 = vsel %vm878, %v1180, 0
        %v1216 = vsel %vm878, %v1182, 0
        %v1219 = vsel %vm878, %v1184, 0
        %1221 = vmatprep.subr.bf16.mxu0 0
        %1222 = vmatpush1.bf16.xpose.msra.mxu0 %v1198
        %1223 = vmatprep.subr.bf16.mxu0 0
        %1224 = vmatpush1.bf16.xpose.msra.mxu0 %v1201
        %1225 = vmatprep.subr.bf16.mxu0 0
        %1226 = vmatpush1.bf16.xpose.msra.mxu0 %v1204
        %1227 = vmatprep.subr.bf16.mxu0 0
        %1228 = vmatpush1.bf16.xpose.msra.mxu0 %v1207
        %1229 = vmatprep.subr.bf16.mxu0 0
        %1230 = vmatpush1.bf16.xpose.msra.mxu0 %v1210
        %1231 = vmatprep.subr.bf16.mxu0 0
        %1232 = vmatpush1.bf16.xpose.msra.mxu0 %v1213
        %1233 = vmatprep.subr.bf16.mxu0 0
        %1234 = vmatpush1.bf16.xpose.msra.mxu0 %v1216
        %1235 = vmatprep.subr.bf16.mxu0 0
        %1236 = vmatpush1.bf16.xpose.msra.mxu0 %v1219
        %1237 = vmatprep.subr.bf16.mxu0 0
        %1238 = vmatpush1.bf16.xpose.msra.mxu0 0
        %1239 = vmatprep.subr.bf16.mxu0 0
        %1240 = vmatpush1.bf16.xpose.msra.mxu0 0
        %1241 = vmatprep.subr.bf16.mxu0 0
        %1242 = vmatpush1.bf16.xpose.msra.mxu0 0
        %1243 = vmatprep.subr.bf16.mxu0 0
        %1244 = vmatpush1.bf16.xpose.msra.mxu0 0
        %1245 = vmatprep.subr.bf16.mxu0 0
        %1246 = vmatpush1.bf16.xpose.msra.mxu0 0
        %1247 = vmatprep.subr.bf16.mxu0 0
        %1248 = vmatpush1.bf16.xpose.msra.mxu0 0
        %1249 = vmatprep.subr.bf16.mxu0 0
        %1250 = vmatpush1.bf16.xpose.msra.mxu0 0
        %1251 = vmatprep.subr.bf16.mxu0 0
        %1252 = vmatpush1.bf16.xpose.msra.mxu0 0
        %1253 = vmatprep.mubr.bf16.mxu0 0
        %1254 = vmatmul.mubr.bf16.gmra.mrb[0].mxu0 %v1186
        %v1255 = vpop.f32.mrb[0].mxu0
        %v1256 = vadd.f32 %v850, %v1255
        %v1257 = vpop.f32.mrb[0].mxu0
        %v1258 = vpop.f32.mrb[0].mxu0
        %v1259 = vadd.f32 %v851, %v1258
        %v1260 = vpop.f32.mrb[0].mxu0
        %1261 = vmatprep.mubr.bf16.mxu0 0
        %1262 = vmatmul.mubr.bf16.gmra.mrb[0].mxu0 %v1189
        %v1263 = vpop.f32.mrb[0].mxu0
        %v1264 = vadd.f32 %v852, %v1263
        %v1265 = vpop.f32.mrb[0].mxu0
        %v1266 = vpop.f32.mrb[0].mxu0
        %v1267 = vadd.f32 %v853, %v1266
        %v1268 = vpop.f32.mrb[0].mxu0
        %1269 = vmatprep.mubr.bf16.mxu0 0
        %1270 = vmatmul.mubr.bf16.gmra.mrb[0].mxu0 %v1192
        %v1271 = vpop.f32.mrb[0].mxu0
        %v1272 = vadd.f32 %v854, %v1271
        %v1273 = vpop.f32.mrb[0].mxu0
        %v1274 = vpop.f32.mrb[0].mxu0
        %v1275 = vadd.f32 %v855, %v1274
        %v1276 = vpop.f32.mrb[0].mxu0
        %1277 = vmatprep.mubr.bf16.mxu0 0
        %1278 = vmatmul.mubr.bf16.gmra.mrb[0].mxu0 %v1195
        %v1279 = vpop.f32.mrb[0].mxu0
        %v1280 = vadd.f32 %v856, %v1279
        %v1281 = vpop.f32.mrb[0].mxu0
        %v1282 = vpop.f32.mrb[0].mxu0
        %v1283 = vadd.f32 %v857, %v1282
        %v1284 = vpop.f32.mrb[0].mxu0
        %1285 = vdwg.mxu0
        %1286 = vmax.xlane.f32.xlu0 %v1256
        %v1287 = vpop.xlane.xlu0 %1286
        %1288 = vmax.xlane.f32.xlu0 %v1259
        %v1289 = vpop.xlane.xlu0 %1288
        %1290 = vmax.xlane.f32.xlu0 %v1264
        %v1291 = vpop.xlane.xlu0 %1290
        %1292 = vmax.xlane.f32.xlu0 %v1267
        %v1293 = vpop.xlane.xlu0 %1292
        %1294 = vmax.xlane.f32.xlu0 %v1272
        %v1295 = vpop.xlane.xlu0 %1294
        %1296 = vmax.xlane.f32.xlu0 %v1275
        %v1297 = vpop.xlane.xlu0 %1296
        %1298 = vmax.xlane.f32.xlu0 %v1280
        %v1299 = vpop.xlane.xlu0 %1298
        %1300 = vmax.xlane.f32.xlu0 %v1283
        %v1301 = vpop.xlane.xlu0 %1300
        %v1302 = vsub.f32 %v1256, %v1287
        %v1303 = vsub.f32 %v1259, %v1289
        %v1304 = vsub.f32 %v1264, %v1291
        %v1305 = vsub.f32 %v1267, %v1293
        %v1306 = vsub.f32 %v1272, %v1295
        %v1307 = vsub.f32 %v1275, %v1297
        %v1308 = vsub.f32 %v1280, %v1299
        %v1309 = vsub.f32 %v1283, %v1301
        %v1310 = vmul.f32 %v1302, 1.442695
        %v1311 = vpow.pop %v1310
        %v1312 = vmul.f32 %v1303, 1.442695
        %v1313 = vpow.pop %v1312
        %v1314 = vmul.f32 %v1304, 1.442695
        %v1315 = vpow.pop %v1314
        %v1316 = vmul.f32 %v1305, 1.442695
        %v1317 = vpow.pop %v1316
        %v1318 = vmul.f32 %v1306, 1.442695
        %v1319 = vpow.pop %v1318
        %v1320 = vmul.f32 %v1307, 1.442695
        %v1321 = vpow.pop %v1320
        %v1322 = vmul.f32 %v1308, 1.442695
        %v1323 = vpow.pop %v1322
        %v1324 = vmul.f32 %v1309, 1.442695
        %v1325 = vpow.pop %v1324
        %1326 = vadd.xlane.f32.xlu0 %v1311
        %v1327 = vpop.xlane.xlu0 %1326
        %1328 = vadd.xlane.f32.xlu0 %v1313
        %v1329 = vpop.xlane.xlu0 %1328
        %1330 = vadd.xlane.f32.xlu0 %v1315
        %v1331 = vpop.xlane.xlu0 %1330
        %1332 = vadd.xlane.f32.xlu0 %v1317
        %v1333 = vpop.xlane.xlu0 %1332
        %1334 = vadd.xlane.f32.xlu0 %v1319
        %v1335 = vpop.xlane.xlu0 %1334
        %1336 = vadd.xlane.f32.xlu0 %v1321
        %v1337 = vpop.xlane.xlu0 %1336
        %1338 = vadd.xlane.f32.xlu0 %v1323
        %v1339 = vpop.xlane.xlu0 %1338
        %1340 = vadd.xlane.f32.xlu0 %v1325
        %v1341 = vpop.xlane.xlu0 %1340
        %v1342 = vrcp.pop %v1327
        %v1343 = vrcp.pop %v1329
        %v1344 = vrcp.pop %v1331
        %v1345 = vrcp.pop %v1333
        %v1346 = vrcp.pop %v1335
        %v1347 = vrcp.pop %v1337
        %v1348 = vrcp.pop %v1339
        %v1349 = vrcp.pop %v1341
        %v1350 = vmul.f32 %v1311, %v1342
        %v1351 = vmul.f32 %v1313, %v1343
        %v1352 = vmul.f32 %v1315, %v1344
        %v1353 = vmul.f32 %v1317, %v1345
        %v1354 = vmul.f32 %v1319, %v1346
        %v1355 = vmul.f32 %v1321, %v1347
        %v1356 = vmul.f32 %v1323, %v1348
        %v1357 = vmul.f32 %v1325, %v1349
        %v1358 = vpack.c.bf16 %v1351, %v1350
        %v1359 = vpack.c.bf16 %v1353, %v1352
        %v1360 = vpack.c.bf16 %v1355, %v1354
        %v1361 = vpack.c.bf16 %v1357, %v1356
        %1370 = vrot.lane.b32.xlu0 %v1141, 96
        %v1371 = vpop.permute.xlu0 %1370
        %1372 = vrot.lane.b32.xlu0 %v1142, 96
        %v1373 = vpop.permute.xlu0 %1372
        %1374 = vrot.lane.b32.xlu0 %v1143, 96
        %v1375 = vpop.permute.xlu0 %1374
        %1376 = vrot.lane.b32.xlu0 %v1144, 96
        %v1377 = vpop.permute.xlu0 %1376
        %1378 = vrot.lane.b32.xlu0 %v1145, 96
        %v1379 = vpop.permute.xlu0 %1378
        %1380 = vrot.lane.b32.xlu0 %v1146, 96
        %v1381 = vpop.permute.xlu0 %1380
        %1382 = vrot.lane.b32.xlu0 %v1147, 96
        %v1383 = vpop.permute.xlu0 %1382
        %1384 = vrot.lane.b32.xlu0 %v1148, 96
        %v1385 = vpop.permute.xlu0 %1384
        %1394 = vmatprep.subr.bf16.mxu0 0
        %1395 = vmatpush1.bf16.msra.mxu0 %v1371
        %1396 = vmatprep.subr.bf16.mxu0 0
        %1397 = vmatpush1.bf16.msra.mxu0 %v1373
        %1398 = vmatprep.subr.bf16.mxu0 0
        %1399 = vmatpush1.bf16.msra.mxu0 %v1375
        %1400 = vmatprep.subr.bf16.mxu0 0
        %1401 = vmatpush1.bf16.msra.mxu0 %v1377
        %1402 = vmatprep.subr.bf16.mxu0 0
        %1403 = vmatpush1.bf16.msra.mxu0 %v1379
        %1404 = vmatprep.subr.bf16.mxu0 0
        %1405 = vmatpush1.bf16.msra.mxu0 %v1381
        %1406 = vmatprep.subr.bf16.mxu0 0
        %1407 = vmatpush1.bf16.msra.mxu0 %v1383
        %1408 = vmatprep.subr.bf16.mxu0 0
        %1409 = vmatpush1.bf16.msra.mxu0 %v1385
        %1410 = vmatprep.subr.bf16.mxu0 0
        %1411 = vmatpush1.bf16.msra.mxu0 0
        %1412 = vmatprep.subr.bf16.mxu0 0
        %1413 = vmatpush1.bf16.msra.mxu0 0
        %1414 = vmatprep.subr.bf16.mxu0 0
        %1415 = vmatpush1.bf16.msra.mxu0 0
        %1416 = vmatprep.subr.bf16.mxu0 0
        %1417 = vmatpush1.bf16.msra.mxu0 0
        %1418 = vmatprep.subr.bf16.mxu0 0
        %1419 = vmatpush1.bf16.msra.mxu0 0
        %1420 = vmatprep.subr.bf16.mxu0 0
        %1421 = vmatpush1.bf16.msra.mxu0 0
        %1422 = vmatprep.subr.bf16.mxu0 0
        %1423 = vmatpush1.bf16.msra.mxu0 0
        %1424 = vmatprep.subr.bf16.mxu0 0
        %1425 = vmatpush1.bf16.msra.mxu0 0
        %1426 = vmatprep.mubr.bf16.mxu0 0
        %1427 = vmatmul.mubr.bf16.gmra.mrb[0].mxu0 %v1358
        %v1428 = vpop.f32.mrb[0].mxu0
        %v1429 = vadd.f32 0.0, %v1428
        %v1430 = vpop.f32.mrb[0].mxu0
        %v1431 = vpop.f32.mrb[0].mxu0
        %v1432 = vadd.f32 0.0, %v1431
        %v1433 = vpop.f32.mrb[0].mxu0
        %1434 = vmatprep.mubr.bf16.mxu0 0
        %1435 = vmatmul.mubr.bf16.gmra.mrb[0].mxu0 %v1359
        %v1436 = vpop.f32.mrb[0].mxu0
        %v1437 = vadd.f32 0.0, %v1436
        %v1438 = vpop.f32.mrb[0].mxu0
        %v1439 = vpop.f32.mrb[0].mxu0
        %v1440 = vadd.f32 0.0, %v1439
        %v1441 = vpop.f32.mrb[0].mxu0
        %1442 = vmatprep.mubr.bf16.mxu0 0
        %1443 = vmatmul.mubr.bf16.gmra.mrb[0].mxu0 %v1360
        %v1444 = vpop.f32.mrb[0].mxu0
        %v1445 = vadd.f32 0.0, %v1444
        %v1446 = vpop.f32.mrb[0].mxu0
        %v1447 = vpop.f32.mrb[0].mxu0
        %v1448 = vadd.f32 0.0, %v1447
        %v1449 = vpop.f32.mrb[0].mxu0
        %1450 = vmatprep.mubr.bf16.mxu0 0
        %1451 = vmatmul.mubr.bf16.gmra.mrb[0].mxu0 %v1361
        %v1452 = vpop.f32.mrb[0].mxu0
        %v1453 = vadd.f32 0.0, %v1452
        %v1454 = vpop.f32.mrb[0].mxu0
        %v1455 = vpop.f32.mrb[0].mxu0
        %v1456 = vadd.f32 0.0, %v1455
        %v1457 = vpop.f32.mrb[0].mxu0
        %1458 = vdwg.mxu0
        %v1459 = vpack.c.bf16 %v1432, %v1429
        %v1460 = vpack.c.bf16 %v1440, %v1437
        %v1461 = vpack.c.bf16 %v1448, %v1445
        %v1462 = vpack.c.bf16 %v1456, %v1453
        %1467 = vrot.lane.b32.xlu0 %v1459, 32
        %v1468 = vpop.permute.xlu0 %1467
        %1469 = vrot.lane.b32.xlu0 %v1460, 32
        %v1470 = vpop.permute.xlu0 %1469
        %1471 = vrot.lane.b32.xlu0 %v1461, 32
        %v1472 = vpop.permute.xlu0 %1471
        %1473 = vrot.lane.b32.xlu0 %v1462, 32
        %v1474 = vpop.permute.xlu0 %1473
        %vm1479 = vcmask 523520
        %1480 = vst.msk [vmem:[#allocation4] sm:$0xff] %vm1479, %v1468
        %1481 = vst.msk [vmem:[#allocation4 + $0x8] sm:$0xff] %vm1479, %v1470
        %1482 = vst.msk [vmem:[#allocation4 + $0x10] sm:$0xff] %vm1479, %v1472
        %1483 = vst.msk [vmem:[#allocation4 + $0x18] sm:$0xff] %vm1479, %v1474
        %v1484 = vld [vmem:[#allocation2] sm:$0xff]
        %v1485 = vld [vmem:[#allocation2 + $0x8] sm:$0xff]
        %v1486 = vld [vmem:[#allocation2 + $0x10] sm:$0xff]
        %v1487 = vld [vmem:[#allocation2 + $0x18] sm:$0xff]
        %v1488 = vld [vmem:[#allocation3] sm:$0xff]
        %v1489 = vld [vmem:[#allocation3 + $0x10] sm:$0xff]
        %v1490 = vld [vmem:[#allocation3 + $0x20] sm:$0xff]
        %v1491 = vld [vmem:[#allocation3 + $0x30] sm:$0xff]
        %v1492 = vld [vmem:[#allocation3 + $0x40] sm:$0xff]
        %v1493 = vld [vmem:[#allocation3 + $0x50] sm:$0xff]
        %v1494 = vld [vmem:[#allocation3 + $0x60] sm:$0xff]
        %v1495 = vld [vmem:[#allocation3 + $0x70] sm:$0xff]
        %v1496 = vld [vmem:[#allocation3 + $0x8] sm:$0xff]
        %v1497 = vld [vmem:[#allocation3 + $0x18] sm:$0xff]
        %v1498 = vld [vmem:[#allocation3 + $0x28] sm:$0xff]
        %v1499 = vld [vmem:[#allocation3 + $0x38] sm:$0xff]
        %v1500 = vld [vmem:[#allocation3 + $0x48] sm:$0xff]
        %v1501 = vld [vmem:[#allocation3 + $0x58] sm:$0xff]
        %v1502 = vld [vmem:[#allocation3 + $0x68] sm:$0xff]
        %v1503 = vld [vmem:[#allocation3 + $0x78] sm:$0xff]
        %1508 = vrot.lane.b32.xlu0 %v1484, 64
        %v1509 = vpop.permute.xlu0 %1508
        %1510 = vrot.lane.b32.xlu0 %v1485, 64
        %v1511 = vpop.permute.xlu0 %1510
        %1512 = vrot.lane.b32.xlu0 %v1486, 64
        %v1513 = vpop.permute.xlu0 %1512
        %1514 = vrot.lane.b32.xlu0 %v1487, 64
        %v1515 = vpop.permute.xlu0 %1514
        %1524 = vrot.lane.b32.xlu0 %v1488, 64
        %v1525 = vpop.permute.xlu0 %1524
        %1526 = vrot.lane.b32.xlu0 %v1489, 64
        %v1527 = vpop.permute.xlu0 %1526
        %1528 = vrot.lane.b32.xlu0 %v1490, 64
        %v1529 = vpop.permute.xlu0 %1528
        %1530 = vrot.lane.b32.xlu0 %v1491, 64
        %v1531 = vpop.permute.xlu0 %1530
        %1532 = vrot.lane.b32.xlu0 %v1492, 64
        %v1533 = vpop.permute.xlu0 %1532
        %1534 = vrot.lane.b32.xlu0 %v1493, 64
        %v1535 = vpop.permute.xlu0 %1534
        %1536 = vrot.lane.b32.xlu0 %v1494, 64
        %v1537 = vpop.permute.xlu0 %1536
        %1538 = vrot.lane.b32.xlu0 %v1495, 64
        %v1539 = vpop.permute.xlu0 %1538
        %v1541 = vsel %vm878, %v1509, 0
        %v1544 = vsel %vm878, %v1511, 0
        %v1547 = vsel %vm878, %v1513, 0
        %v1550 = vsel %vm878, %v1515, 0
        %v1553 = vsel %vm878, %v1525, 0
        %v1556 = vsel %vm878, %v1527, 0
        %v1559 = vsel %vm878, %v1529, 0
        %v1562 = vsel %vm878, %v1531, 0
        %v1565 = vsel %vm878, %v1533, 0
        %v1568 = vsel %vm878, %v1535, 0
        %v1571 = vsel %vm878, %v1537, 0
        %v1574 = vsel %vm878, %v1539, 0
        %1576 = vmatprep.subr.bf16.mxu0 0
        %1577 = vmatpush1.bf16.xpose.msra.mxu0 %v1553
        %1578 = vmatprep.subr.bf16.mxu0 0
        %1579 = vmatpush1.bf16.xpose.msra.mxu0 %v1556
        %1580 = vmatprep.subr.bf16.mxu0 0
        %1581 = vmatpush1.bf16.xpose.msra.mxu0 %v1559
        %1582 = vmatprep.subr.bf16.mxu0 0
        %1583 = vmatpush1.bf16.xpose.msra.mxu0 %v1562
        %1584 = vmatprep.subr.bf16.mxu0 0
        %1585 = vmatpush1.bf16.xpose.msra.mxu0 %v1565
        %1586 = vmatprep.subr.bf16.mxu0 0
        %1587 = vmatpush1.bf16.xpose.msra.mxu0 %v1568
        %1588 = vmatprep.subr.bf16.mxu0 0
        %1589 = vmatpush1.bf16.xpose.msra.mxu0 %v1571
        %1590 = vmatprep.subr.bf16.mxu0 0
        %1591 = vmatpush1.bf16.xpose.msra.mxu0 %v1574
        %1592 = vmatprep.subr.bf16.mxu0 0
        %1593 = vmatpush1.bf16.xpose.msra.mxu0 0
        %1594 = vmatprep.subr.bf16.mxu0 0
        %1595 = vmatpush1.bf16.xpose.msra.mxu0 0
        %1596 = vmatprep.subr.bf16.mxu0 0
        %1597 = vmatpush1.bf16.xpose.msra.mxu0 0
        %1598 = vmatprep.subr.bf16.mxu0 0
        %1599 = vmatpush1.bf16.xpose.msra.mxu0 0
        %1600 = vmatprep.subr.bf16.mxu0 0
        %1601 = vmatpush1.bf16.xpose.msra.mxu0 0
        %1602 = vmatprep.subr.bf16.mxu0 0
        %1603 = vmatpush1.bf16.xpose.msra.mxu0 0
        %1604 = vmatprep.subr.bf16.mxu0 0
        %1605 = vmatpush1.bf16.xpose.msra.mxu0 0
        %1606 = vmatprep.subr.bf16.mxu0 0
        %1607 = vmatpush1.bf16.xpose.msra.mxu0 0
        %1608 = vmatprep.mubr.bf16.mxu0 0
        %1609 = vmatmul.mubr.bf16.gmra.mrb[0].mxu0 %v1541
        %v1610 = vpop.f32.mrb[0].mxu0
        %v1611 = vadd.f32 %v850, %v1610
        %v1612 = vpop.f32.mrb[0].mxu0
        %v1613 = vpop.f32.mrb[0].mxu0
        %v1614 = vadd.f32 %v851, %v1613
        %v1615 = vpop.f32.mrb[0].mxu0
        %1616 = vmatprep.mubr.bf16.mxu0 0
        %1617 = vmatmul.mubr.bf16.gmra.mrb[0].mxu0 %v1544
        %v1618 = vpop.f32.mrb[0].mxu0
        %v1619 = vadd.f32 %v852, %v1618
        %v1620 = vpop.f32.mrb[0].mxu0
        %v1621 = vpop.f32.mrb[0].mxu0
        %v1622 = vadd.f32 %v853, %v1621
        %v1623 = vpop.f32.mrb[0].mxu0
        %1624 = vmatprep.mubr.bf16.mxu0 0
        %1625 = vmatmul.mubr.bf16.gmra.mrb[0].mxu0 %v1547
        %v1626 = vpop.f32.mrb[0].mxu0
        %v1627 = vadd.f32 %v854, %v1626
        %v1628 = vpop.f32.mrb[0].mxu0
        %v1629 = vpop.f32.mrb[0].mxu0
        %v1630 = vadd.f32 %v855, %v1629
        %v1631 = vpop.f32.mrb[0].mxu0
        %1632 = vmatprep.mubr.bf16.mxu0 0
        %1633 = vmatmul.mubr.bf16.gmra.mrb[0].mxu0 %v1550
        %v1634 = vpop.f32.mrb[0].mxu0
        %v1635 = vadd.f32 %v856, %v1634
        %v1636 = vpop.f32.mrb[0].mxu0
        %v1637 = vpop.f32.mrb[0].mxu0
        %v1638 = vadd.f32 %v857, %v1637
        %v1639 = vpop.f32.mrb[0].mxu0
        %1640 = vdwg.mxu0
        %1641 = vmax.xlane.f32.xlu0 %v1611
        %v1642 = vpop.xlane.xlu0 %1641
        %1643 = vmax.xlane.f32.xlu0 %v1614
        %v1644 = vpop.xlane.xlu0 %1643
        %1645 = vmax.xlane.f32.xlu0 %v1619
        %v1646 = vpop.xlane.xlu0 %1645
        %1647 = vmax.xlane.f32.xlu0 %v1622
        %v1648 = vpop.xlane.xlu0 %1647
        %1649 = vmax.xlane.f32.xlu0 %v1627
        %v1650 = vpop.xlane.xlu0 %1649
        %1651 = vmax.xlane.f32.xlu0 %v1630
        %v1652 = vpop.xlane.xlu0 %1651
        %1653 = vmax.xlane.f32.xlu0 %v1635
        %v1654 = vpop.xlane.xlu0 %1653
        %1655 = vmax.xlane.f32.xlu0 %v1638
        %v1656 = vpop.xlane.xlu0 %1655
        %v1657 = vsub.f32 %v1611, %v1642
        %v1658 = vsub.f32 %v1614, %v1644
        %v1659 = vsub.f32 %v1619, %v1646
        %v1660 = vsub.f32 %v1622, %v1648
        %v1661 = vsub.f32 %v1627, %v1650
        %v1662 = vsub.f32 %v1630, %v1652
        %v1663 = vsub.f32 %v1635, %v1654
        %v1664 = vsub.f32 %v1638, %v1656
        %v1665 = vmul.f32 %v1657, 1.442695
        %v1666 = vpow.pop %v1665
        %v1667 = vmul.f32 %v1658, 1.442695
        %v1668 = vpow.pop %v1667
        %v1669 = vmul.f32 %v1659, 1.442695
        %v1670 = vpow.pop %v1669
        %v1671 = vmul.f32 %v1660, 1.442695
        %v1672 = vpow.pop %v1671
        %v1673 = vmul.f32 %v1661, 1.442695
        %v1674 = vpow.pop %v1673
        %v1675 = vmul.f32 %v1662, 1.442695
        %v1676 = vpow.pop %v1675
        %v1677 = vmul.f32 %v1663, 1.442695
        %v1678 = vpow.pop %v1677
        %v1679 = vmul.f32 %v1664, 1.442695
        %v1680 = vpow.pop %v1679
        %1681 = vadd.xlane.f32.xlu0 %v1666
        %v1682 = vpop.xlane.xlu0 %1681
        %1683 = vadd.xlane.f32.xlu0 %v1668
        %v1684 = vpop.xlane.xlu0 %1683
        %1685 = vadd.xlane.f32.xlu0 %v1670
        %v1686 = vpop.xlane.xlu0 %1685
        %1687 = vadd.xlane.f32.xlu0 %v1672
        %v1688 = vpop.xlane.xlu0 %1687
        %1689 = vadd.xlane.f32.xlu0 %v1674
        %v1690 = vpop.xlane.xlu0 %1689
        %1691 = vadd.xlane.f32.xlu0 %v1676
        %v1692 = vpop.xlane.xlu0 %1691
        %1693 = vadd.xlane.f32.xlu0 %v1678
        %v1694 = vpop.xlane.xlu0 %1693
        %1695 = vadd.xlane.f32.xlu0 %v1680
        %v1696 = vpop.xlane.xlu0 %1695
        %v1697 = vrcp.pop %v1682
        %v1698 = vrcp.pop %v1684
        %v1699 = vrcp.pop %v1686
        %v1700 = vrcp.pop %v1688
        %v1701 = vrcp.pop %v1690
        %v1702 = vrcp.pop %v1692
        %v1703 = vrcp.pop %v1694
        %v1704 = vrcp.pop %v1696
        %v1705 = vmul.f32 %v1666, %v1697
        %v1706 = vmul.f32 %v1668, %v1698
        %v1707 = vmul.f32 %v1670, %v1699
        %v1708 = vmul.f32 %v1672, %v1700
        %v1709 = vmul.f32 %v1674, %v1701
        %v1710 = vmul.f32 %v1676, %v1702
        %v1711 = vmul.f32 %v1678, %v1703
        %v1712 = vmul.f32 %v1680, %v1704
        %v1713 = vpack.c.bf16 %v1706, %v1705
        %v1714 = vpack.c.bf16 %v1708, %v1707
        %v1715 = vpack.c.bf16 %v1710, %v1709
        %v1716 = vpack.c.bf16 %v1712, %v1711
        %1725 = vrot.lane.b32.xlu0 %v1496, 64
        %v1726 = vpop.permute.xlu0 %1725
        %1727 = vrot.lane.b32.xlu0 %v1497, 64
        %v1728 = vpop.permute.xlu0 %1727
        %1729 = vrot.lane.b32.xlu0 %v1498, 64
        %v1730 = vpop.permute.xlu0 %1729
        %1731 = vrot.lane.b32.xlu0 %v1499, 64
        %v1732 = vpop.permute.xlu0 %1731
        %1733 = vrot.lane.b32.xlu0 %v1500, 64
        %v1734 = vpop.permute.xlu0 %1733
        %1735 = vrot.lane.b32.xlu0 %v1501, 64
        %v1736 = vpop.permute.xlu0 %1735
        %1737 = vrot.lane.b32.xlu0 %v1502, 64
        %v1738 = vpop.permute.xlu0 %1737
        %1739 = vrot.lane.b32.xlu0 %v1503, 64
        %v1740 = vpop.permute.xlu0 %1739
        %1749 = vmatprep.subr.bf16.mxu0 0
        %1750 = vmatpush1.bf16.msra.mxu0 %v1726
        %1751 = vmatprep.subr.bf16.mxu0 0
        %1752 = vmatpush1.bf16.msra.mxu0 %v1728
        %1753 = vmatprep.subr.bf16.mxu0 0
        %1754 = vmatpush1.bf16.msra.mxu0 %v1730
        %1755 = vmatprep.subr.bf16.mxu0 0
        %1756 = vmatpush1.bf16.msra.mxu0 %v1732
        %1757 = vmatprep.subr.bf16.mxu0 0
        %1758 = vmatpush1.bf16.msra.mxu0 %v1734
        %1759 = vmatprep.subr.bf16.mxu0 0
        %1760 = vmatpush1.bf16.msra.mxu0 %v1736
        %1761 = vmatprep.subr.bf16.mxu0 0
        %1762 = vmatpush1.bf16.msra.mxu0 %v1738
        %1763 = vmatprep.subr.bf16.mxu0 0
        %1764 = vmatpush1.bf16.msra.mxu0 %v1740
        %1765 = vmatprep.subr.bf16.mxu0 0
        %1766 = vmatpush1.bf16.msra.mxu0 0
        %1767 = vmatprep.subr.bf16.mxu0 0
        %1768 = vmatpush1.bf16.msra.mxu0 0
        %1769 = vmatprep.subr.bf16.mxu0 0
        %1770 = vmatpush1.bf16.msra.mxu0 0
        %1771 = vmatprep.subr.bf16.mxu0 0
        %1772 = vmatpush1.bf16.msra.mxu0 0
        %1773 = vmatprep.subr.bf16.mxu0 0
        %1774 = vmatpush1.bf16.msra.mxu0 0
        %1775 = vmatprep.subr.bf16.mxu0 0
        %1776 = vmatpush1.bf16.msra.mxu0 0
        %1777 = vmatprep.subr.bf16.mxu0 0
        %1778 = vmatpush1.bf16.msra.mxu0 0
        %1779 = vmatprep.subr.bf16.mxu0 0
        %1780 = vmatpush1.bf16.msra.mxu0 0
        %1781 = vmatprep.mubr.bf16.mxu0 0
        %1782 = vmatmul.mubr.bf16.gmra.mrb[0].mxu0 %v1713
        %v1783 = vpop.f32.mrb[0].mxu0
        %v1784 = vadd.f32 0.0, %v1783
        %v1785 = vpop.f32.mrb[0].mxu0
        %v1786 = vpop.f32.mrb[0].mxu0
        %v1787 = vadd.f32 0.0, %v1786
        %v1788 = vpop.f32.mrb[0].mxu0
        %1789 = vmatprep.mubr.bf16.mxu0 0
        %1790 = vmatmul.mubr.bf16.gmra.mrb[0].mxu0 %v1714
        %v1791 = vpop.f32.mrb[0].mxu0
        %v1792 = vadd.f32 0.0, %v1791
        %v1793 = vpop.f32.mrb[0].mxu0
        %v1794 = vpop.f32.mrb[0].mxu0
        %v1795 = vadd.f32 0.0, %v1794
        %v1796 = vpop.f32.mrb[0].mxu0
        %1797 = vmatprep.mubr.bf16.mxu0 0
        %1798 = vmatmul.mubr.bf16.gmra.mrb[0].mxu0 %v1715
        %v1799 = vpop.f32.mrb[0].mxu0
        %v1800 = vadd.f32 0.0, %v1799
        %v1801 = vpop.f32.mrb[0].mxu0
        %v1802 = vpop.f32.mrb[0].mxu0
        %v1803 = vadd.f32 0.0, %v1802
        %v1804 = vpop.f32.mrb[0].mxu0
        %1805 = vmatprep.mubr.bf16.mxu0 0
        %1806 = vmatmul.mubr.bf16.gmra.mrb[0].mxu0 %v1716
        %v1807 = vpop.f32.mrb[0].mxu0
        %v1808 = vadd.f32 0.0, %v1807
        %v1809 = vpop.f32.mrb[0].mxu0
        %v1810 = vpop.f32.mrb[0].mxu0
        %v1811 = vadd.f32 0.0, %v1810
        %v1812 = vpop.f32.mrb[0].mxu0
        %1813 = vdwg.mxu0
        %v1814 = vpack.c.bf16 %v1787, %v1784
        %v1815 = vpack.c.bf16 %v1795, %v1792
        %v1816 = vpack.c.bf16 %v1803, %v1800
        %v1817 = vpack.c.bf16 %v1811, %v1808
        %1822 = vrot.lane.b32.xlu0 %v1814, 64
        %v1823 = vpop.permute.xlu0 %1822
        %1824 = vrot.lane.b32.xlu0 %v1815, 64
        %v1825 = vpop.permute.xlu0 %1824
        %1826 = vrot.lane.b32.xlu0 %v1816, 64
        %v1827 = vpop.permute.xlu0 %1826
        %1828 = vrot.lane.b32.xlu0 %v1817, 64
        %v1829 = vpop.permute.xlu0 %1828
        %vm1834 = vcmask 785920
        %1835 = vst.msk [vmem:[#allocation4] sm:$0xff] %vm1834, %v1823
        %1836 = vst.msk [vmem:[#allocation4 + $0x8] sm:$0xff] %vm1834, %v1825
        %1837 = vst.msk [vmem:[#allocation4 + $0x10] sm:$0xff] %vm1834, %v1827
        %1838 = vst.msk [vmem:[#allocation4 + $0x18] sm:$0xff] %vm1834, %v1829
        %v1839 = vld [vmem:[#allocation2] sm:$0xff]
        %v1840 = vld [vmem:[#allocation2 + $0x8] sm:$0xff]
        %v1841 = vld [vmem:[#allocation2 + $0x10] sm:$0xff]
        %v1842 = vld [vmem:[#allocation2 + $0x18] sm:$0xff]
        %v1843 = vld [vmem:[#allocation3] sm:$0xff]
        %v1844 = vld [vmem:[#allocation3 + $0x10] sm:$0xff]
        %v1845 = vld [vmem:[#allocation3 + $0x20] sm:$0xff]
        %v1846 = vld [vmem:[#allocation3 + $0x30] sm:$0xff]
        %v1847 = vld [vmem:[#allocation3 + $0x40] sm:$0xff]
        %v1848 = vld [vmem:[#allocation3 + $0x50] sm:$0xff]
        %v1849 = vld [vmem:[#allocation3 + $0x60] sm:$0xff]
        %v1850 = vld [vmem:[#allocation3 + $0x70] sm:$0xff]
        %v1851 = vld [vmem:[#allocation3 + $0x8] sm:$0xff]
        %v1852 = vld [vmem:[#allocation3 + $0x18] sm:$0xff]
        %v1853 = vld [vmem:[#allocation3 + $0x28] sm:$0xff]
        %v1854 = vld [vmem:[#allocation3 + $0x38] sm:$0xff]
        %v1855 = vld [vmem:[#allocation3 + $0x48] sm:$0xff]
        %v1856 = vld [vmem:[#allocation3 + $0x58] sm:$0xff]
        %v1857 = vld [vmem:[#allocation3 + $0x68] sm:$0xff]
        %v1858 = vld [vmem:[#allocation3 + $0x78] sm:$0xff]
        %1863 = vrot.lane.b32.xlu0 %v1839, 32
        %v1864 = vpop.permute.xlu0 %1863
        %1865 = vrot.lane.b32.xlu0 %v1840, 32
        %v1866 = vpop.permute.xlu0 %1865
        %1867 = vrot.lane.b32.xlu0 %v1841, 32
        %v1868 = vpop.permute.xlu0 %1867
        %1869 = vrot.lane.b32.xlu0 %v1842, 32
        %v1870 = vpop.permute.xlu0 %1869
        %1879 = vrot.lane.b32.xlu0 %v1843, 32
        %v1880 = vpop.permute.xlu0 %1879
        %1881 = vrot.lane.b32.xlu0 %v1844, 32
        %v1882 = vpop.permute.xlu0 %1881
        %1883 = vrot.lane.b32.xlu0 %v1845, 32
        %v1884 = vpop.permute.xlu0 %1883
        %1885 = vrot.lane.b32.xlu0 %v1846, 32
        %v1886 = vpop.permute.xlu0 %1885
        %1887 = vrot.lane.b32.xlu0 %v1847, 32
        %v1888 = vpop.permute.xlu0 %1887
        %1889 = vrot.lane.b32.xlu0 %v1848, 32
        %v1890 = vpop.permute.xlu0 %1889
        %1891 = vrot.lane.b32.xlu0 %v1849, 32
        %v1892 = vpop.permute.xlu0 %1891
        %1893 = vrot.lane.b32.xlu0 %v1850, 32
        %v1894 = vpop.permute.xlu0 %1893
        %v1896 = vsel %vm878, %v1864, 0
        %v1899 = vsel %vm878, %v1866, 0
        %v1902 = vsel %vm878, %v1868, 0
        %v1905 = vsel %vm878, %v1870, 0
        %v1908 = vsel %vm878, %v1880, 0
        %v1911 = vsel %vm878, %v1882, 0
        %v1914 = vsel %vm878, %v1884, 0
        %v1917 = vsel %vm878, %v1886, 0
        %v1920 = vsel %vm878, %v1888, 0
        %v1923 = vsel %vm878, %v1890, 0
        %v1926 = vsel %vm878, %v1892, 0
        %v1929 = vsel %vm878, %v1894, 0
        %1931 = vmatprep.subr.bf16.mxu0 0
        %1932 = vmatpush1.bf16.xpose.msra.mxu0 %v1908
        %1933 = vmatprep.subr.bf16.mxu0 0
        %1934 = vmatpush1.bf16.xpose.msra.mxu0 %v1911
        %1935 = vmatprep.subr.bf16.mxu0 0
        %1936 = vmatpush1.bf16.xpose.msra.mxu0 %v1914
        %1937 = vmatprep.subr.bf16.mxu0 0
        %1938 = vmatpush1.bf16.xpose.msra.mxu0 %v1917
        %1939 = vmatprep.subr.bf16.mxu0 0
        %1940 = vmatpush1.bf16.xpose.msra.mxu0 %v1920
        %1941 = vmatprep.subr.bf16.mxu0 0
        %1942 = vmatpush1.bf16.xpose.msra.mxu0 %v1923
        %1943 = vmatprep.subr.bf16.mxu0 0
        %1944 = vmatpush1.bf16.xpose.msra.mxu0 %v1926
        %1945 = vmatprep.subr.bf16.mxu0 0
        %1946 = vmatpush1.bf16.xpose.msra.mxu0 %v1929
        %1947 = vmatprep.subr.bf16.mxu0 0
        %1948 = vmatpush1.bf16.xpose.msra.mxu0 0
        %1949 = vmatprep.subr.bf16.mxu0 0
        %1950 = vmatpush1.bf16.xpose.msra.mxu0 0
        %1951 = vmatprep.subr.bf16.mxu0 0
        %1952 = vmatpush1.bf16.xpose.msra.mxu0 0
        %1953 = vmatprep.subr.bf16.mxu0 0
        %1954 = vmatpush1.bf16.xpose.msra.mxu0 0
        %1955 = vmatprep.subr.bf16.mxu0 0
        %1956 = vmatpush1.bf16.xpose.msra.mxu0 0
        %1957 = vmatprep.subr.bf16.mxu0 0
        %1958 = vmatpush1.bf16.xpose.msra.mxu0 0
        %1959 = vmatprep.subr.bf16.mxu0 0
        %1960 = vmatpush1.bf16.xpose.msra.mxu0 0
        %1961 = vmatprep.subr.bf16.mxu0 0
        %1962 = vmatpush1.bf16.xpose.msra.mxu0 0
        %1963 = vmatprep.mubr.bf16.mxu0 0
        %1964 = vmatmul.mubr.bf16.gmra.mrb[0].mxu0 %v1896
        %v1965 = vpop.f32.mrb[0].mxu0
        %v1966 = vadd.f32 %v850, %v1965
        %v1967 = vpop.f32.mrb[0].mxu0
        %v1968 = vpop.f32.mrb[0].mxu0
        %v1969 = vadd.f32 %v851, %v1968
        %v1970 = vpop.f32.mrb[0].mxu0
        %1971 = vmatprep.mubr.bf16.mxu0 0
        %1972 = vmatmul.mubr.bf16.gmra.mrb[0].mxu0 %v1899
        %v1973 = vpop.f32.mrb[0].mxu0
        %v1974 = vadd.f32 %v852, %v1973
        %v1975 = vpop.f32.mrb[0].mxu0
        %v1976 = vpop.f32.mrb[0].mxu0
        %v1977 = vadd.f32 %v853, %v1976
        %v1978 = vpop.f32.mrb[0].mxu0
        %1979 = vmatprep.mubr.bf16.mxu0 0
        %1980 = vmatmul.mubr.bf16.gmra.mrb[0].mxu0 %v1902
        %v1981 = vpop.f32.mrb[0].mxu0
        %v1982 = vadd.f32 %v854, %v1981
        %v1983 = vpop.f32.mrb[0].mxu0
        %v1984 = vpop.f32.mrb[0].mxu0
        %v1985 = vadd.f32 %v855, %v1984
        %v1986 = vpop.f32.mrb[0].mxu0
        %1987 = vmatprep.mubr.bf16.mxu0 0
        %1988 = vmatmul.mubr.bf16.gmra.mrb[0].mxu0 %v1905
        %v1989 = vpop.f32.mrb[0].mxu0
        %v1990 = vadd.f32 %v856, %v1989
        %v1991 = vpop.f32.mrb[0].mxu0
        %v1992 = vpop.f32.mrb[0].mxu0
        %v1993 = vadd.f32 %v857, %v1992
        %v1994 = vpop.f32.mrb[0].mxu0
        %1995 = vdwg.mxu0
        %1996 = vmax.xlane.f32.xlu0 %v1966
        %v1997 = vpop.xlane.xlu0 %1996
        %1998 = vmax.xlane.f32.xlu0 %v1969
        %v1999 = vpop.xlane.xlu0 %1998
        %2000 = vmax.xlane.f32.xlu0 %v1974
        %v2001 = vpop.xlane.xlu0 %2000
        %2002 = vmax.xlane.f32.xlu0 %v1977
        %v2003 = vpop.xlane.xlu0 %2002
        %2004 = vmax.xlane.f32.xlu0 %v1982
        %v2005 = vpop.xlane.xlu0 %2004
        %2006 = vmax.xlane.f32.xlu0 %v1985
        %v2007 = vpop.xlane.xlu0 %2006
        %2008 = vmax.xlane.f32.xlu0 %v1990
        %v2009 = vpop.xlane.xlu0 %2008
        %2010 = vmax.xlane.f32.xlu0 %v1993
        %v2011 = vpop.xlane.xlu0 %2010
        %v2012 = vsub.f32 %v1966, %v1997
        %v2013 = vsub.f32 %v1969, %v1999
        %v2014 = vsub.f32 %v1974, %v2001
        %v2015 = vsub.f32 %v1977, %v2003
        %v2016 = vsub.f32 %v1982, %v2005
        %v2017 = vsub.f32 %v1985, %v2007
        %v2018 = vsub.f32 %v1990, %v2009
        %v2019 = vsub.f32 %v1993, %v2011
        %v2020 = vmul.f32 %v2012, 1.442695
        %v2021 = vpow.pop %v2020
        %v2022 = vmul.f32 %v2013, 1.442695
        %v2023 = vpow.pop %v2022
        %v2024 = vmul.f32 %v2014, 1.442695
        %v2025 = vpow.pop %v2024
        %v2026 = vmul.f32 %v2015, 1.442695
        %v2027 = vpow.pop %v2026
        %v2028 = vmul.f32 %v2016, 1.442695
        %v2029 = vpow.pop %v2028
        %v2030 = vmul.f32 %v2017, 1.442695
        %v2031 = vpow.pop %v2030
        %v2032 = vmul.f32 %v2018, 1.442695
        %v2033 = vpow.pop %v2032
        %v2034 = vmul.f32 %v2019, 1.442695
        %v2035 = vpow.pop %v2034
        %2036 = vadd.xlane.f32.xlu0 %v2021
        %v2037 = vpop.xlane.xlu0 %2036
        %2038 = vadd.xlane.f32.xlu0 %v2023
        %v2039 = vpop.xlane.xlu0 %2038
        %2040 = vadd.xlane.f32.xlu0 %v2025
        %v2041 = vpop.xlane.xlu0 %2040
        %2042 = vadd.xlane.f32.xlu0 %v2027
        %v2043 = vpop.xlane.xlu0 %2042
        %2044 = vadd.xlane.f32.xlu0 %v2029
        %v2045 = vpop.xlane.xlu0 %2044
        %2046 = vadd.xlane.f32.xlu0 %v2031
        %v2047 = vpop.xlane.xlu0 %2046
        %2048 = vadd.xlane.f32.xlu0 %v2033
        %v2049 = vpop.xlane.xlu0 %2048
        %2050 = vadd.xlane.f32.xlu0 %v2035
        %v2051 = vpop.xlane.xlu0 %2050
        %v2052 = vrcp.pop %v2037
        %v2053 = vrcp.pop %v2039
        %v2054 = vrcp.pop %v2041
        %v2055 = vrcp.pop %v2043
        %v2056 = vrcp.pop %v2045
        %v2057 = vrcp.pop %v2047
        %v2058 = vrcp.pop %v2049
        %v2059 = vrcp.pop %v2051
        %v2060 = vmul.f32 %v2021, %v2052
        %v2061 = vmul.f32 %v2023, %v2053
        %v2062 = vmul.f32 %v2025, %v2054
        %v2063 = vmul.f32 %v2027, %v2055
        %v2064 = vmul.f32 %v2029, %v2056
        %v2065 = vmul.f32 %v2031, %v2057
        %v2066 = vmul.f32 %v2033, %v2058
        %v2067 = vmul.f32 %v2035, %v2059
        %v2068 = vpack.c.bf16 %v2061, %v2060
        %v2069 = vpack.c.bf16 %v2063, %v2062
        %v2070 = vpack.c.bf16 %v2065, %v2064
        %v2071 = vpack.c.bf16 %v2067, %v2066
        %2080 = vrot.lane.b32.xlu0 %v1851, 32
        %v2081 = vpop.permute.xlu0 %2080
        %2082 = vrot.lane.b32.xlu0 %v1852, 32
        %v2083 = vpop.permute.xlu0 %2082
        %2084 = vrot.lane.b32.xlu0 %v1853, 32
        %v2085 = vpop.permute.xlu0 %2084
        %2086 = vrot.lane.b32.xlu0 %v1854, 32
        %v2087 = vpop.permute.xlu0 %2086
        %2088 = vrot.lane.b32.xlu0 %v1855, 32
        %v2089 = vpop.permute.xlu0 %2088
        %2090 = vrot.lane.b32.xlu0 %v1856, 32
        %v2091 = vpop.permute.xlu0 %2090
        %2092 = vrot.lane.b32.xlu0 %v1857, 32
        %v2093 = vpop.permute.xlu0 %2092
        %2094 = vrot.lane.b32.xlu0 %v1858, 32
        %v2095 = vpop.permute.xlu0 %2094
        %2104 = vmatprep.subr.bf16.mxu0 0
        %2105 = vmatpush1.bf16.msra.mxu0 %v2081
        %2106 = vmatprep.subr.bf16.mxu0 0
        %2107 = vmatpush1.bf16.msra.mxu0 %v2083
        %2108 = vmatprep.subr.bf16.mxu0 0
        %2109 = vmatpush1.bf16.msra.mxu0 %v2085
        %2110 = vmatprep.subr.bf16.mxu0 0
        %2111 = vmatpush1.bf16.msra.mxu0 %v2087
        %2112 = vmatprep.subr.bf16.mxu0 0
        %2113 = vmatpush1.bf16.msra.mxu0 %v2089
        %2114 = vmatprep.subr.bf16.mxu0 0
        %2115 = vmatpush1.bf16.msra.mxu0 %v2091
        %2116 = vmatprep.subr.bf16.mxu0 0
        %2117 = vmatpush1.bf16.msra.mxu0 %v2093
        %2118 = vmatprep.subr.bf16.mxu0 0
        %2119 = vmatpush1.bf16.msra.mxu0 %v2095
        %2120 = vmatprep.subr.bf16.mxu0 0
        %2121 = vmatpush1.bf16.msra.mxu0 0
        %2122 = vmatprep.subr.bf16.mxu0 0
        %2123 = vmatpush1.bf16.msra.mxu0 0
        %2124 = vmatprep.subr.bf16.mxu0 0
        %2125 = vmatpush1.bf16.msra.mxu0 0
        %2126 = vmatprep.subr.bf16.mxu0 0
        %2127 = vmatpush1.bf16.msra.mxu0 0
        %2128 = vmatprep.subr.bf16.mxu0 0
        %2129 = vmatpush1.bf16.msra.mxu0 0
        %2130 = vmatprep.subr.bf16.mxu0 0
        %2131 = vmatpush1.bf16.msra.mxu0 0
        %2132 = vmatprep.subr.bf16.mxu0 0
        %2133 = vmatpush1.bf16.msra.mxu0 0
        %2134 = vmatprep.subr.bf16.mxu0 0
        %2135 = vmatpush1.bf16.msra.mxu0 0
        %2136 = vmatprep.mubr.bf16.mxu0 0
        %2137 = vmatmul.mubr.bf16.gmra.mrb[0].mxu0 %v2068
        %v2138 = vpop.f32.mrb[0].mxu0
        %v2139 = vadd.f32 0.0, %v2138
        %v2140 = vpop.f32.mrb[0].mxu0
        %v2141 = vpop.f32.mrb[0].mxu0
        %v2142 = vadd.f32 0.0, %v2141
        %v2143 = vpop.f32.mrb[0].mxu0
        %2144 = vmatprep.mubr.bf16.mxu0 0
        %2145 = vmatmul.mubr.bf16.gmra.mrb[0].mxu0 %v2069
        %v2146 = vpop.f32.mrb[0].mxu0
        %v2147 = vadd.f32 0.0, %v2146
        %v2148 = vpop.f32.mrb[0].mxu0
        %v2149 = vpop.f32.mrb[0].mxu0
        %v2150 = vadd.f32 0.0, %v2149
        %v2151 = vpop.f32.mrb[0].mxu0
        %2152 = vmatprep.mubr.bf16.mxu0 0
        %2153 = vmatmul.mubr.bf16.gmra.mrb[0].mxu0 %v2070
        %v2154 = vpop.f32.mrb[0].mxu0
        %v2155 = vadd.f32 0.0, %v2154
        %v2156 = vpop.f32.mrb[0].mxu0
        %v2157 = vpop.f32.mrb[0].mxu0
        %v2158 = vadd.f32 0.0, %v2157
        %v2159 = vpop.f32.mrb[0].mxu0
        %2160 = vmatprep.mubr.bf16.mxu0 0
        %2161 = vmatmul.mubr.bf16.gmra.mrb[0].mxu0 %v2071
        %v2162 = vpop.f32.mrb[0].mxu0
        %v2163 = vadd.f32 0.0, %v2162
        %v2164 = vpop.f32.mrb[0].mxu0
        %v2165 = vpop.f32.mrb[0].mxu0
        %v2166 = vadd.f32 0.0, %v2165
        %v2167 = vpop.f32.mrb[0].mxu0
        %2168 = vdwg.mxu0
        %v2169 = vpack.c.bf16 %v2142, %v2139
        %v2170 = vpack.c.bf16 %v2150, %v2147
        %v2171 = vpack.c.bf16 %v2158, %v2155
        %v2172 = vpack.c.bf16 %v2166, %v2163
        %2177 = vrot.lane.b32.xlu0 %v2169, 96
        %v2178 = vpop.permute.xlu0 %2177
        %2179 = vrot.lane.b32.xlu0 %v2170, 96
        %v2180 = vpop.permute.xlu0 %2179
        %2181 = vrot.lane.b32.xlu0 %v2171, 96
        %v2182 = vpop.permute.xlu0 %2181
        %2183 = vrot.lane.b32.xlu0 %v2172, 96
        %v2184 = vpop.permute.xlu0 %2183
        %vm2189 = vcmask 1048320
        %2190 = vst.msk [vmem:[#allocation4] sm:$0xff] %vm2189, %v2178
        %2191 = vst.msk [vmem:[#allocation4 + $0x8] sm:$0xff] %vm2189, %v2180
        %2192 = vst.msk [vmem:[#allocation4 + $0x10] sm:$0xff] %vm2189, %v2182
        %2193 = vst.msk [vmem:[#allocation4 + $0x18] sm:$0xff] %vm2189, %v2184
        %v2194 = vld [vmem:[#allocation4] sm:$0xff]
        %v2195 = vld [vmem:[#allocation4 + $0x8] sm:$0xff]
        %v2196 = vld [vmem:[#allocation4 + $0x10] sm:$0xff]
        %v2197 = vld [vmem:[#allocation4 + $0x18] sm:$0xff]
        %v2198 = vld [vmem:[#allocation13] sm:$0xf]
        %v2199 = vld [vmem:[#allocation13 + $0x4] sm:$0xf]
        %v2200 = vld [vmem:[#allocation13 + $0x8] sm:$0xf]
        %v2201 = vld [vmem:[#allocation13 + $0xc] sm:$0xf]
        %v2202 = vld [vmem:[#allocation13 + $0x10] sm:$0xf]
        %v2203 = vld [vmem:[#allocation13 + $0x14] sm:$0xf]
        %v2204 = vld [vmem:[#allocation13 + $0x18] sm:$0xf]
        %v2205 = vld [vmem:[#allocation13 + $0x1c] sm:$0xf]
        %v2206 = vld [vmem:[#allocation13 + $0x20] sm:$0xf]
        %v2207 = vld [vmem:[#allocation13 + $0x24] sm:$0xf]
        %v2208 = vld [vmem:[#allocation13 + $0x28] sm:$0xf]
        %v2209 = vld [vmem:[#allocation13 + $0x2c] sm:$0xf]
        %v2210 = vld [vmem:[#allocation13 + $0x30] sm:$0xf]
        %v2211 = vld [vmem:[#allocation13 + $0x34] sm:$0xf]
        %v2212 = vld [vmem:[#allocation13 + $0x38] sm:$0xf]
        %v2213 = vld [vmem:[#allocation13 + $0x3c] sm:$0xf]
        %v2230 = vunpack.c.l.b16 %v2198
        %v2231 = vunpack.c.l.b16 %v2199
        %v2232 = vunpack.c.l.b16 %v2200
        %v2233 = vunpack.c.l.b16 %v2201
        %v2234 = vunpack.c.l.b16 %v2202
        %v2235 = vunpack.c.l.b16 %v2203
        %v2236 = vunpack.c.l.b16 %v2204
        %v2237 = vunpack.c.l.b16 %v2205
        %v2238 = vunpack.c.l.b16 %v2206
        %v2239 = vunpack.c.l.b16 %v2207
        %v2240 = vunpack.c.l.b16 %v2208
        %v2241 = vunpack.c.l.b16 %v2209
        %v2242 = vunpack.c.l.b16 %v2210
        %v2243 = vunpack.c.l.b16 %v2211
        %v2244 = vunpack.c.l.b16 %v2212
        %v2245 = vunpack.c.l.b16 %v2213
        %v2246 = vpack.c.b16 %v2231, %v2230
        %v2247 = vpack.c.b16 %v2233, %v2232
        %v2248 = vpack.c.b16 %v2235, %v2234
        %v2249 = vpack.c.b16 %v2237, %v2236
        %v2250 = vpack.c.b16 %v2239, %v2238
        %v2251 = vpack.c.b16 %v2241, %v2240
        %v2252 = vpack.c.b16 %v2243, %v2242
        %v2253 = vpack.c.b16 %v2245, %v2244
        %2262 = vmatprep.subr.bf16.mxu0 0
        %2263 = vmatpush1.bf16.msra.mxu0 %v2246
        %2264 = vmatprep.subr.bf16.mxu0 0
        %2265 = vmatpush1.bf16.msra.mxu0 %v2247
        %2266 = vmatprep.subr.bf16.mxu0 0
        %2267 = vmatpush1.bf16.msra.mxu0 %v2248
        %2268 = vmatprep.subr.bf16.mxu0 0
        %2269 = vmatpush1.bf16.msra.mxu0 %v2249
        %2270 = vmatprep.subr.bf16.mxu0 0
        %2271 = vmatpush1.bf16.msra.mxu0 %v2250
        %2272 = vmatprep.subr.bf16.mxu0 0
        %2273 = vmatpush1.bf16.msra.mxu0 %v2251
        %2274 = vmatprep.subr.bf16.mxu0 0
        %2275 = vmatpush1.bf16.msra.mxu0 %v2252
        %2276 = vmatprep.subr.bf16.mxu0 0
        %2277 = vmatpush1.bf16.msra.mxu0 %v2253
        %2278 = vmatprep.subr.bf16.mxu0 0
        %2279 = vmatpush1.bf16.msra.mxu0 0
        %2280 = vmatprep.subr.bf16.mxu0 0
        %2281 = vmatpush1.bf16.msra.mxu0 0
        %2282 = vmatprep.subr.bf16.mxu0 0
        %2283 = vmatpush1.bf16.msra.mxu0 0
        %2284 = vmatprep.subr.bf16.mxu0 0
        %2285 = vmatpush1.bf16.msra.mxu0 0
        %2286 = vmatprep.subr.bf16.mxu0 0
        %2287 = vmatpush1.bf16.msra.mxu0 0
        %2288 = vmatprep.subr.bf16.mxu0 0
        %2289 = vmatpush1.bf16.msra.mxu0 0
        %2290 = vmatprep.subr.bf16.mxu0 0
        %2291 = vmatpush1.bf16.msra.mxu0 0
        %2292 = vmatprep.subr.bf16.mxu0 0
        %2293 = vmatpush1.bf16.msra.mxu0 0
        %2294 = vmatprep.mubr.bf16.mxu0 0
        %2295 = vmatmul.mubr.bf16.gmra.mrb[0].mxu0 %v2194
        %v2296 = vpop.f32.mrb[0].mxu0
        %v2297 = vadd.f32 0.0, %v2296
        %v2298 = vpop.f32.mrb[0].mxu0
        %v2299 = vpop.f32.mrb[0].mxu0
        %v2300 = vadd.f32 0.0, %v2299
        %v2301 = vpop.f32.mrb[0].mxu0
        %2302 = vmatprep.mubr.bf16.mxu0 0
        %2303 = vmatmul.mubr.bf16.gmra.mrb[0].mxu0 %v2195
        %v2304 = vpop.f32.mrb[0].mxu0
        %v2305 = vadd.f32 0.0, %v2304
        %v2306 = vpop.f32.mrb[0].mxu0
        %v2307 = vpop.f32.mrb[0].mxu0
        %v2308 = vadd.f32 0.0, %v2307
        %v2309 = vpop.f32.mrb[0].mxu0
        %2310 = vmatprep.mubr.bf16.mxu0 0
        %2311 = vmatmul.mubr.bf16.gmra.mrb[0].mxu0 %v2196
        %v2312 = vpop.f32.mrb[0].mxu0
        %v2313 = vadd.f32 0.0, %v2312
        %v2314 = vpop.f32.mrb[0].mxu0
        %v2315 = vpop.f32.mrb[0].mxu0
        %v2316 = vadd.f32 0.0, %v2315
        %v2317 = vpop.f32.mrb[0].mxu0
        %2318 = vmatprep.mubr.bf16.mxu0 0
        %2319 = vmatmul.mubr.bf16.gmra.mrb[0].mxu0 %v2197
        %v2320 = vpop.f32.mrb[0].mxu0
        %v2321 = vadd.f32 0.0, %v2320
        %v2322 = vpop.f32.mrb[0].mxu0
        %v2323 = vpop.f32.mrb[0].mxu0
        %v2324 = vadd.f32 0.0, %v2323
        %v2325 = vpop.f32.mrb[0].mxu0
        %2326 = vdwg.mxu0
        %2327 = vst [vmem:[%s343] sm:$0xff] %v2297
        %2328 = vst [vmem:[%s343 + $0x8] sm:$0xff] %v2300
        %2329 = vst [vmem:[%s343 + $0x10] sm:$0xff] %v2305
        %2330 = vst [vmem:[%s343 + $0x18] sm:$0xff] %v2308
        %2331 = vst [vmem:[%s343 + $0x20] sm:$0xff] %v2313
        %2332 = vst [vmem:[%s343 + $0x28] sm:$0xff] %v2316
        %2333 = vst [vmem:[%s343 + $0x30] sm:$0xff] %v2321
        %2334 = vst [vmem:[%s343 + $0x38] sm:$0xff] %v2324
        %s2335 = sand.u32 %s165, 1
        %s2336 = scalar_lea.sflag [#allocation7], %s2335
        %s2337 = sand.u32 %s165, 1
        %s2338 = smul.addr %s2337, 64
        %s2339 = scalar_lea.vmem [#allocation14], %s2338
        // Predicated region
        $region61: #{tpu_custom_call.1} parent=39 // pred_check
          %p2340 = pneg %p175
        $region62: #{tpu_custom_call.1} parent=39 // pred_check_branch
          %2342 = sbr.rel (%p2340) target = $region64
        $region63: #{tpu_custom_call.1} parent=39 // pred_region
          %s2343 = smul.u32 8, %s31
          %s2345 = ssub.s32 1024, 1024
          %2346 = vsyncadd %s2336, %s2345
          %s2347 = smul.addr %s30, 16
          %s2348 = sadd.s32 %s2343, %s2347
          %s2349 = smul.addr %s2348, 128
          %s2350 = scalar_lea.hbm %s5, %s2349
          %s2351 = sshll.u32 %s2339, 4
          %s2352 = int_to_ptr.vmem [resolvable:$true] %s2351
          %2357 = dma.vmem_to_hbm [thread:$0]  %s2352, 1024, %s2350, %s2336, 128, 128, 8
        $region64: #{tpu_custom_call.1} parent=39 // pred_fallthru
          _
      $region40: #{tpu_custom_call.1} parent=5 // pred_fallthru
        _
      %p2358 = scmp.le.s32.totalorder 2, %s21
      // Predicated region
      $region65: #{tpu_custom_call.1} parent=5 // pred_check
        %p2359 = pneg %p2358
      $region66: #{tpu_custom_call.1} parent=5 // pred_check_branch
        %2361 = sbr.rel (%p2359) target = $region68
      $region67: #{tpu_custom_call.1} parent=5 // pred_region
        %s2362 = ssub.s32 %s21, 2
        // Predicated region
        $region69: #{tpu_custom_call.1} parent=67 // pred_check
          %p2363 = pneg %p181
        $region70: #{tpu_custom_call.1} parent=67 // pred_check_branch
          %2365 = sbr.rel (%p2363) target = $region72
        $region71: #{tpu_custom_call.1} parent=67 // pred_region
          %s2366 = sand.u32 %s166, 1
          %s2367 = scalar_lea.sflag [#allocation7], %s2366
          %s2368 = sand.u32 %s166, 1
          %s2369 = smul.addr %s2368, 64
          %s2370 = scalar_lea.vmem [#allocation14], %s2369
          %2371 = dma.done %s2367, 1024
        $region72: #{tpu_custom_call.1} parent=67 // pred_fallthru
          _
      $region68: #{tpu_custom_call.1} parent=5 // pred_fallthru
        _
    $region6: #{tpu_custom_call.1} parent=1 // loop_footer
      %s25 = sadd.s32 1, %s21
    $region7: #{tpu_custom_call.1} parent=1 // loop_footer_branch
      %20 = sbr.rel target = $region3
    $region8: #{tpu_custom_call.1} parent=1 // loop_exit
      _
    %2372 = vsyncpa [#allocation6], 1
    %s2373 = scalar_lea.sflag [#allocation6], 1
    %2374 = vsyncpa %s2373, 1
    %2375 = vsyncpa [#allocation9], 1
    %s2376 = scalar_lea.sflag [#allocation9], 1
    %2377 = vsyncpa %s2376, 1
    %2378 = vsyncpa [#allocation12], 1
    %2379 = vsyncpa [#allocation7], 1
    %s2380 = scalar_lea.sflag [#allocation7], 1
    %2381 = vsyncpa %s2380, 1

</llo_original>
